<compile_context>
chip_gen: v7x
topology: tpu7x:2x2x1
jax: 0.10.0
libtpu: 0.0.40
codegen_flags: <defaults>
</compile_context>

<pallas_src>
import functools
import math

import jax
import jax.numpy as jnp
from jax.experimental import pallas as pl
from jax.experimental.pallas import tpu as pltpu


# ----------------------------------------------------------------------------
# Pallas kernel: sinusoidal embedding + proj_d / proj_a + reduction over k
# ----------------------------------------------------------------------------
def _geo_embed_kernel(da_ref, div_ref, wd_ref, wa_ref, b_ref, out_ref, sc_ref, *,
                      angle_k, tm, reduction_a, transpose_out):
    half = div_ref.shape[0]                 # D/2
    div = div_ref[...]                      # (D/2, 1) f32

    # Fill the (D, (k+1)*tm) bf16 sin|cos slab; lane slot 0 = distance, 1..k = angles.
    # sin/cos stay in f32 on the EUP (v5e has no bf16 EUP); only the MXU operands
    # are bf16.
    for s in range(angle_k + 1):
        da_s = da_ref[s:s + 1, :]           # (1, tm) f32
        om = div * da_s                     # (D/2, tm) outer-product broadcast
        sc_ref[0:half, s * tm:(s + 1) * tm] = jnp.sin(om).astype(sc_ref.dtype)
        sc_ref[half:2 * half, s * tm:(s + 1) * tm] = jnp.cos(om).astype(sc_ref.dtype)

    # One fused D-deep bf16 matmul per branch (f32 accumulate on the MXU).
    d_out = jnp.dot(wd_ref[...], sc_ref[:, 0:tm],
                    preferred_element_type=jnp.float32)                     # (D, tm)
    a_all = jnp.dot(wa_ref[...], sc_ref[:, tm:(angle_k + 1) * tm],
                    preferred_element_type=jnp.float32)                     # (D, k*tm)

    # Reduction over k via static, 128-aligned lane slices ('mean' scale is
    # already folded into Wa in the wrapper).
    acc = a_all[:, 0:tm]
    for kk in range(1, angle_k):
        blk = a_all[:, kk * tm:(kk + 1) * tm]
        acc = jnp.maximum(acc, blk) if reduction_a == "max" else acc + blk

    res = d_out + acc + b_ref[...]                                          # (D, tm)
    if transpose_out:
        out_ref[0] = jnp.transpose(res).astype(out_ref.dtype)               # (tm, D)
    else:
        out_ref[0] = res.astype(out_ref.dtype)                              # (D, tm)


# ----------------------------------------------------------------------------
# Index computation (plain-JAX glue, mirrors get_embedding_indices).
# Angular indices are returned with k as the LEADING axis: (k, B, N, N), so the
# wrapper can build its (k+1, M_pad) slab with reshapes only (no big transpose).
# ----------------------------------------------------------------------------
def get_embedding_indices(points, sigma_d, factor_a, angle_k):
    B, N, _ = points.shape
    xy = jnp.einsum("bnc,bmc->bnm", points, points)
    sq = jnp.sum(points ** 2, axis=-1)
    sq_dist = jnp.clip(sq[:, :, None] - 2.0 * xy + sq[:, None, :], 0.0, None)
    dist_map = jnp.sqrt(sq_dist)                          # (B, N, N)
    d_indices = dist_map / sigma_d

    # TODO(synk): kNN selection (topk smallest) + gather stays in plain JAX
    # (data-dependent gather); ties may order differently than torch.topk.
    knn_idx = jnp.argsort(dist_map, axis=2)[:, :, 1:angle_k + 1]        # (B, N, k)
    knn_points = jax.vmap(lambda pts, idx: pts[idx])(points, knn_idx)   # (B, N, k, 3)

    ref_vec = knn_points - points[:, :, None, :]          # (B, N, k, 3)
    anc_vec = points[:, None, :, :] - points[:, :, None, :]             # (B, N, N, 3)
    ref_e = jnp.transpose(ref_vec, (2, 0, 1, 3))[:, :, :, None, :]      # (k, B, N, 1, 3)
    anc_e = anc_vec[None, :, :, :, :]                     # (1, B, N, N, 3)
    cross = jnp.cross(ref_e, anc_e)                       # (k, B, N, N, 3)
    sin_v = jnp.linalg.norm(cross, axis=-1)
    cos_v = jnp.sum(ref_e * anc_e, axis=-1)
    angles = jnp.arctan2(sin_v, cos_v)                    # (k, B, N, N)
    a_indices = angles * factor_a
    return d_indices, a_indices


# ----------------------------------------------------------------------------
# Tiling helpers
# ----------------------------------------------------------------------------
def _round_up(x, m):
    return ((x + m - 1) // m) * m


def _choose_tiling(M, tile_m):
    """Pick (tm, m_pad, nt). tm is a multiple of 128; prefer tm == tile_m (pad M
    up to it) so the lane width never degenerates to 128; split small inputs into
    two tiles so v7x megacore has work on both TensorCores."""
    assert tile_m % 128 == 0 and tile_m >= 128
    m128 = _round_up(M, 128)
    if m128 <= tile_m:
        tm = _round_up(max(m128 // 2, 128), 128) if m128 > 128 else 128
        m_pad = _round_up(m128, tm)
    else:
        tm = tile_m
        m_pad = _round_up(M, tm)
    return tm, m_pad, m_pad // tm


def _vmem_bytes_estimate(D, k, tm):
    blk_in = 2 * 4 * (k + 1) * tm          # da block, double-buffered, f32
    blk_out = 2 * 4 * D * tm               # out block, double-buffered, f32
    weights = 2 * 2 * D * D + 4 * (D // 2 + D)
    scratch = 2 * D * (k + 1) * tm         # bf16 sin|cos slab
    inter = 4 * D * tm * (k + 3)           # f32 matmul results / acc / transpose, rough
    return blk_in + blk_out + weights + scratch + inter


# ----------------------------------------------------------------------------
# Wrapper (parameter setup + pallas_call)
# ----------------------------------------------------------------------------
def geometric_structure_embedding(points, params, *, hidden_dim, sigma_d, sigma_a,
                                  angle_k, reduction_a="max", tile_m=512):
    # tile_m notes per generation: v6e can take 1024 (128 MiB VMEM); v7x should
    # stay at 512 (64 MiB VMEM/TC); v5e may need 256 at very large D.
    B, N, _ = points.shape
    D = hidden_dim
    assert D % 2 == 0, "Sinusoidal embedding requires even hidden_dim"
    assert params["Wd"].shape == (D, D) and params["Wa"].shape == (D, D)
    assert reduction_a in ("max", "mean")

    M = B * N * N
    factor_a = 180.0 / (sigma_a * math.pi)

    d_idx, a_idx = get_embedding_indices(points, sigma_d, factor_a, angle_k)

    tm, m_pad, nt = _choose_tiling(M, tile_m)

    # (k+1, M_pad) slab: row 0 = d, rows 1..k = angles (reshape/concat/pad only).
    da = jnp.concatenate([d_idx.reshape(1, M).astype(jnp.float32),
                          a_idx.reshape(angle_k, M).astype(jnp.float32)], axis=0)
    da = jnp.pad(da, ((0, 0), (0, m_pad - M)))                    # (k+1, M_pad)

    # sinusoidal divisors as a (D/2, 1) column (broadcast along lanes in-kernel)
    div = jnp.exp(jnp.arange(0, D, 2, dtype=jnp.float32) *
                  (-math.log(10000.0) / D)).reshape(D // 2, 1)

    # torch sinusoidal embedding interleaves [sin0, cos0, sin1, cos1, ...]:
    # de-interleave each Linear weight and concat -> [W_sin | W_cos] (D, D),
    # so each branch is one fused D-deep contraction. Cast to bf16 (MXU operands).
    wd = params["Wd"].astype(jnp.float32)
    wa = params["Wa"].astype(jnp.float32)
    wd_cat = jnp.concatenate([wd[:, 0::2], wd[:, 1::2]], axis=1)
    wa_cat = jnp.concatenate([wa[:, 0::2], wa[:, 1::2]], axis=1)
    if reduction_a == "mean":
        wa_cat = wa_cat * (1.0 / float(angle_k))    # fold 1/k into the weights
    wd_cat = wd_cat.astype(jnp.bfloat16)
    wa_cat = wa_cat.astype(jnp.bfloat16)
    b_total = (params["bd"] + params["ba"]).astype(jnp.float32).reshape(D, 1)

    transpose_out = D >= 128   # lane-dense (tm, D) block when D fills lanes

    kernel = functools.partial(_geo_embed_kernel, angle_k=angle_k, tm=tm,
                               reduction_a=reduction_a, transpose_out=transpose_out)

    if transpose_out:
        out_shape = jax.ShapeDtypeStruct((nt, tm, D), jnp.float32)
        out_spec = pl.BlockSpec((1, tm, D), lambda t: (t, 0, 0))
    else:
        out_shape = jax.ShapeDtypeStruct((nt, D, tm), jnp.float32)
        out_spec = pl.BlockSpec((1, D, tm), lambda t: (t, 0, 0))

    cp_kwargs = dict(dimension_semantics=("parallel",))
    est = _vmem_bytes_estimate(D, angle_k, tm)
    if est > (14 << 20):  # raise scoped-VMEM only when the default would be tight
        cp_kwargs["vmem_limit_bytes"] = int(min(est * 3 // 2, 48 << 20))

    out = pl.pallas_call(
        kernel,
        out_shape=out_shape,
        grid=(nt,),
        in_specs=[
            pl.BlockSpec((angle_k + 1, tm), lambda t: (0, t)),   # da slab
            pl.BlockSpec((D // 2, 1), lambda t: (0, 0)),         # div
            pl.BlockSpec((D, D), lambda t: (0, 0)),              # [Wd_sin|Wd_cos] bf16
            pl.BlockSpec((D, D), lambda t: (0, 0)),              # [Wa_sin|Wa_cos] bf16
            pl.BlockSpec((D, 1), lambda t: (0, 0)),              # bd + ba
        ],
        out_specs=out_spec,
        scratch_shapes=[pltpu.VMEM((D, (angle_k + 1) * tm), jnp.bfloat16)],
        compiler_params=pltpu.CompilerParams(**cp_kwargs),
    )(da, div, wd_cat, wa_cat, b_total)

    if transpose_out:
        out = out.reshape(m_pad, D)[:M]
    else:
        out = out.transpose(0, 2, 1).reshape(m_pad, D)[:M]
    return out.reshape(B, N, N, D)


geo_embed_jit = jax.jit(
    geometric_structure_embedding,
    static_argnames=("hidden_dim", "sigma_d", "sigma_a", "angle_k",
                     "reduction_a", "tile_m"))


# ----------------------------------------------------------------------------
# Pure-JAX reference (mirrors the PyTorch module; f32, highest-precision matmul)
# ----------------------------------------------------------------------------
def _reference(points, params, *, hidden_dim, sigma_d, sigma_a, angle_k, reduction_a):
    D = hidden_dim
    factor_a = 180.0 / (sigma_a * math.pi)
    d_idx, a_idx = get_embedding_indices(points, sigma_d, factor_a, angle_k)
    a_idx = jnp.transpose(a_idx, (1, 2, 3, 0))            # (B, N, N, k)

    div_term = jnp.exp(jnp.arange(0, D, 2, dtype=jnp.float32) *
                       (-math.log(10000.0) / D))

    def sinusoidal(x):
        om = x[..., None] * div_term                      # (..., D/2)
        emb = jnp.stack([jnp.sin(om), jnp.cos(om)], axis=-1)
        return emb.reshape(*x.shape, D)                   # interleaved sin/cos

    hp = jax.lax.Precision.HIGHEST
    d_emb = jnp.einsum("...i,oi->...o", sinusoidal(d_idx), params["Wd"],
                       precision=hp) + params["bd"]
    a_emb = jnp.einsum("...i,oi->...o", sinusoidal(a_idx), params["Wa"],
                       precision=hp) + params["ba"]
    if reduction_a == "max":
        a_emb = jnp.max(a_emb, axis=3)
    else:
        a_emb = jnp.mean(a_emb, axis=3)
    return d_emb + a_emb


if __name__ == "__main__":
    sigma_d, sigma_a, angle_k = 0.2, 15.0, 3
    key = jax.random.PRNGKey(0)

    # (D, B, N, reduction): small base case, padded 'mean' case, multi-tile case,
    # and a D>=128 case exercising the in-kernel output transpose path.
    cases = [(32, 2, 8, "max"), (32, 2, 12, "mean"), (32, 1, 40, "max"),
             (128, 1, 24, "mean")]
    for D, B, N, red in cases:
        key, kw1, kw2, kw3, kw4, kp = jax.random.split(key, 6)
        scale = 1.0 / math.sqrt(D)
        params = {
            "Wd": jax.random.normal(kw1, (D, D), dtype=jnp.float32) * scale,
            "bd": jax.random.normal(kw2, (D,), dtype=jnp.float32) * scale,
            "Wa": jax.random.normal(kw3, (D, D), dtype=jnp.float32) * scale,
            "ba": jax.random.normal(kw4, (D,), dtype=jnp.float32) * scale,
        }
        points = jax.random.normal(kp, (B, N, 3), dtype=jnp.float32)

        out = geo_embed_jit(points, params, hidden_dim=D, sigma_d=sigma_d,
                            sigma_a=sigma_a, angle_k=angle_k, reduction_a=red)
        out = jax.block_until_ready(out)

        ref = _reference(points, params, hidden_dim=D, sigma_d=sigma_d,
                         sigma_a=sigma_a, angle_k=angle_k, reduction_a=red)
        ref = jax.block_until_ready(ref)

        assert out.shape == (B, N, N, D), out.shape
        err = float(jnp.max(jnp.abs(out - ref)))
        # bf16 MXU operands with f32 accumulation vs f32-HIGHEST reference:
        # expected agreement is ~1e-2; gate at 2e-2.
        assert jnp.allclose(out, ref, atol=2e-2, rtol=2e-2), (D, B, N, red, err)

    print("KERNEL_OK")
</pallas_src>

<mosaic_0001>
module attributes {stable_mosaic.version = 11 : i64} {
  func.func @_geo_embed_kernel(%arg0: i32, %arg1: memref<4x128xf32, #tpu.memory_space<vmem>>, %arg2: memref<16x1xf32, #tpu.memory_space<vmem>>, %arg3: memref<32x32xbf16, #tpu.memory_space<vmem>>, %arg4: memref<32x32xbf16, #tpu.memory_space<vmem>>, %arg5: memref<32x1xf32, #tpu.memory_space<vmem>>, %arg6: memref<1x32x128xf32, #tpu.memory_space<vmem>>, %arg7: memref<32x512xbf16, #tpu.memory_space<vmem>>) attributes {dimension_semantics = [#tpu.dimension_semantics<parallel>], iteration_bounds = array<i64: 1>, scalar_prefetch = 0 : i64, scratch_operands = 1 : i64, tpu.core_type = #tpu.core_type<tc>, window_params = [{transform_indices = @transform_0, window_bounds = array<i64: 4, 128>}, {pipeline_mode = #tpu.pipeline_mode<synchronous>, transform_indices = @transform_1, window_bounds = array<i64: 16, 1>}, {pipeline_mode = #tpu.pipeline_mode<synchronous>, transform_indices = @transform_2, window_bounds = array<i64: 32, 32>}, {pipeline_mode = #tpu.pipeline_mode<synchronous>, transform_indices = @transform_3, window_bounds = array<i64: 32, 32>}, {pipeline_mode = #tpu.pipeline_mode<synchronous>, transform_indices = @transform_4, window_bounds = array<i64: 32, 1>}, {transform_indices = @transform_5, window_bounds = array<i64: 1, 32, 128>}]} {
    %c0 = arith.constant 0 : index
    %c0_0 = arith.constant 0 : index
    %0 = vector.load %arg2[%c0, %c0_0] : memref<16x1xf32, #tpu.memory_space<vmem>>, vector<16x1xf32>
    %c0_1 = arith.constant 0 : index
    %c0_2 = arith.constant 0 : index
    %1 = vector.load %arg1[%c0_1, %c0_2] : memref<4x128xf32, #tpu.memory_space<vmem>>, vector<1x128xf32>
    %2 = vector.broadcast %0 : vector<16x1xf32> to vector<16x128xf32>
    %3 = vector.broadcast %1 : vector<1x128xf32> to vector<16x128xf32>
    %4 = arith.mulf %2, %3 : vector<16x128xf32>
    %5 = math.sin %4 : vector<16x128xf32>
    %6 = arith.truncf %5 : vector<16x128xf32> to vector<16x128xbf16>
    %c0_3 = arith.constant 0 : index
    %c0_4 = arith.constant 0 : index
    %7 = vector.load %arg7[%c0_3, %c0_4] : memref<32x512xbf16, #tpu.memory_space<vmem>>, vector<16x128xbf16>
    tpu.vector_store %arg7[%c0_3, %c0_4], %6 {strides = array<i32>} : memref<32x512xbf16, #tpu.memory_space<vmem>>, vector<16x128xbf16>,
    %8 = math.cos %4 : vector<16x128xf32>
    %9 = arith.truncf %8 : vector<16x128xf32> to vector<16x128xbf16>
    %c16 = arith.constant 16 : index
    %c0_5 = arith.constant 0 : index
    %10 = vector.load %arg7[%c16, %c0_5] : memref<32x512xbf16, #tpu.memory_space<vmem>>, vector<16x128xbf16>
    tpu.vector_store %arg7[%c16, %c0_5], %9 {strides = array<i32>} : memref<32x512xbf16, #tpu.memory_space<vmem>>, vector<16x128xbf16>,
    %c1 = arith.constant 1 : index
    %c0_6 = arith.constant 0 : index
    %11 = vector.load %arg1[%c1, %c0_6] : memref<4x128xf32, #tpu.memory_space<vmem>>, vector<1x128xf32>
    %12 = vector.broadcast %0 : vector<16x1xf32> to vector<16x128xf32>
    %13 = vector.broadcast %11 : vector<1x128xf32> to vector<16x128xf32>
    %14 = arith.mulf %12, %13 : vector<16x128xf32>
    %15 = math.sin %14 : vector<16x128xf32>
    %16 = arith.truncf %15 : vector<16x128xf32> to vector<16x128xbf16>
    %c0_7 = arith.constant 0 : index
    %c128 = arith.constant 128 : index
    %17 = vector.load %arg7[%c0_7, %c128] : memref<32x512xbf16, #tpu.memory_space<vmem>>, vector<16x128xbf16>
    tpu.vector_store %arg7[%c0_7, %c128], %16 {strides = array<i32>} : memref<32x512xbf16, #tpu.memory_space<vmem>>, vector<16x128xbf16>,
    %18 = math.cos %14 : vector<16x128xf32>
    %19 = arith.truncf %18 : vector<16x128xf32> to vector<16x128xbf16>
    %c16_8 = arith.constant 16 : index
    %c128_9 = arith.constant 128 : index
    %20 = vector.load %arg7[%c16_8, %c128_9] : memref<32x512xbf16, #tpu.memory_space<vmem>>, vector<16x128xbf16>
    tpu.vector_store %arg7[%c16_8, %c128_9], %19 {strides = array<i32>} : memref<32x512xbf16, #tpu.memory_space<vmem>>, vector<16x128xbf16>,
    %c2 = arith.constant 2 : index
    %c0_10 = arith.constant 0 : index
    %21 = vector.load %arg1[%c2, %c0_10] : memref<4x128xf32, #tpu.memory_space<vmem>>, vector<1x128xf32>
    %22 = vector.broadcast %0 : vector<16x1xf32> to vector<16x128xf32>
    %23 = vector.broadcast %21 : vector<1x128xf32> to vector<16x128xf32>
    %24 = arith.mulf %22, %23 : vector<16x128xf32>
    %25 = math.sin %24 : vector<16x128xf32>
    %26 = arith.truncf %25 : vector<16x128xf32> to vector<16x128xbf16>
    %c0_11 = arith.constant 0 : index
    %c256 = arith.constant 256 : index
    %27 = vector.load %arg7[%c0_11, %c256] : memref<32x512xbf16, #tpu.memory_space<vmem>>, vector<16x128xbf16>
    tpu.vector_store %arg7[%c0_11, %c256], %26 {strides = array<i32>} : memref<32x512xbf16, #tpu.memory_space<vmem>>, vector<16x128xbf16>,
    %28 = math.cos %24 : vector<16x128xf32>
    %29 = arith.truncf %28 : vector<16x128xf32> to vector<16x128xbf16>
    %c16_12 = arith.constant 16 : index
    %c256_13 = arith.constant 256 : index
    %30 = vector.load %arg7[%c16_12, %c256_13] : memref<32x512xbf16, #tpu.memory_space<vmem>>, vector<16x128xbf16>
    tpu.vector_store %arg7[%c16_12, %c256_13], %29 {strides = array<i32>} : memref<32x512xbf16, #tpu.memory_space<vmem>>, vector<16x128xbf16>,
    %c3 = arith.constant 3 : index
    %c0_14 = arith.constant 0 : index
    %31 = vector.load %arg1[%c3, %c0_14] : memref<4x128xf32, #tpu.memory_space<vmem>>, vector<1x128xf32>
    %32 = vector.broadcast %0 : vector<16x1xf32> to vector<16x128xf32>
    %33 = vector.broadcast %31 : vector<1x128xf32> to vector<16x128xf32>
    %34 = arith.mulf %32, %33 : vector<16x128xf32>
    %35 = math.sin %34 : vector<16x128xf32>
    %36 = arith.truncf %35 : vector<16x128xf32> to vector<16x128xbf16>
    %c0_15 = arith.constant 0 : index
    %c384 = arith.constant 384 : index
    %37 = vector.load %arg7[%c0_15, %c384] : memref<32x512xbf16, #tpu.memory_space<vmem>>, vector<16x128xbf16>
    tpu.vector_store %arg7[%c0_15, %c384], %36 {strides = array<i32>} : memref<32x512xbf16, #tpu.memory_space<vmem>>, vector<16x128xbf16>,
    %38 = math.cos %34 : vector<16x128xf32>
    %39 = arith.truncf %38 : vector<16x128xf32> to vector<16x128xbf16>
    %c16_16 = arith.constant 16 : index
    %c384_17 = arith.constant 384 : index
    %40 = vector.load %arg7[%c16_16, %c384_17] : memref<32x512xbf16, #tpu.memory_space<vmem>>, vector<16x128xbf16>
    tpu.vector_store %arg7[%c16_16, %c384_17], %39 {strides = array<i32>} : memref<32x512xbf16, #tpu.memory_space<vmem>>, vector<16x128xbf16>,
    %c0_18 = arith.constant 0 : index
    %c0_19 = arith.constant 0 : index
    %41 = vector.load %arg3[%c0_18, %c0_19] : memref<32x32xbf16, #tpu.memory_space<vmem>>, vector<32x32xbf16>
    %c0_20 = arith.constant 0 : index
    %c0_21 = arith.constant 0 : index
    %42 = vector.load %arg7[%c0_20, %c0_21] : memref<32x512xbf16, #tpu.memory_space<vmem>>, vector<32x128xbf16>
    %cst = arith.constant dense<0.000000e+00> : vector<32x128xf32>
    %43 = tpu.matmul %41, %42, %cst {dimension_numbers = #tpu.dot_dimension_numbers<[1], [0], [0], [1], [0, 0, 1, 1], [], []>} : vector<32x32xbf16>, vector<32x128xbf16>, vector<32x128xf32> -> vector<32x128xf32>
    %c0_22 = arith.constant 0 : index
    %c0_23 = arith.constant 0 : index
    %44 = vector.load %arg4[%c0_22, %c0_23] : memref<32x32xbf16, #tpu.memory_space<vmem>>, vector<32x32xbf16>
    %c0_24 = arith.constant 0 : index
    %c128_25 = arith.constant 128 : index
    %45 = vector.load %arg7[%c0_24, %c128_25] : memref<32x512xbf16, #tpu.memory_space<vmem>>, vector<32x384xbf16>
    %cst_26 = arith.constant dense<0.000000e+00> : vector<32x384xf32>
    %46 = tpu.matmul %44, %45, %cst_26 {dimension_numbers = #tpu.dot_dimension_numbers<[1], [0], [0], [1], [0, 0, 1, 1], [], []>} : vector<32x32xbf16>, vector<32x384xbf16>, vector<32x384xf32> -> vector<32x384xf32>
    %47 = vector.extract_strided_slice %46 {offsets = [0, 0], sizes = [32, 128], strides = [1, 1]} : vector<32x384xf32> to vector<32x128xf32>
    %48 = vector.extract_strided_slice %46 {offsets = [0, 128], sizes = [32, 128], strides = [1, 1]} : vector<32x384xf32> to vector<32x128xf32>
    %49 = arith.maximumf %47, %48 : vector<32x128xf32>
    %50 = vector.extract_strided_slice %46 {offsets = [0, 256], sizes = [32, 128], strides = [1, 1]} : vector<32x384xf32> to vector<32x128xf32>
    %51 = arith.maximumf %49, %50 : vector<32x128xf32>
    %52 = arith.addf %43, %51 : vector<32x128xf32>
    %c0_27 = arith.constant 0 : index
    %c0_28 = arith.constant 0 : index
    %53 = vector.load %arg5[%c0_27, %c0_28] : memref<32x1xf32, #tpu.memory_space<vmem>>, vector<32x1xf32>
    %54 = vector.broadcast %53 : vector<32x1xf32> to vector<32x128xf32>
    %55 = arith.addf %52, %54 : vector<32x128xf32>
    %c0_29 = arith.constant 0 : index
    %c0_30 = arith.constant 0 : index
    %c0_31 = arith.constant 0 : index
    %56 = vector.load %arg6[%c0_29, %c0_30, %c0_31] : memref<1x32x128xf32, #tpu.memory_space<vmem>>, vector<1x32x128xf32>
    %57 = vector.shape_cast %56 : vector<1x32x128xf32> to vector<32x128xf32>
    %58 = vector.shape_cast %55 : vector<32x128xf32> to vector<1x32x128xf32>
    tpu.vector_store %arg6[%c0_29, %c0_30, %c0_31], %58 {strides = array<i32>} : memref<1x32x128xf32, #tpu.memory_space<vmem>>, vector<1x32x128xf32>,
    return
  }
  func.func @transform_0(%arg0: i32) -> (i32, i32) {
    %c0_i32 = arith.constant 0 : i32
    %c0_i32_0 = arith.constant 0 : i32
    return %c0_i32, %arg0 : i32, i32
  }
  func.func @transform_1(%arg0: i32) -> (i32, i32) {
    %c0_i32 = arith.constant 0 : i32
    %c0_i32_0 = arith.constant 0 : i32
    %c0_i32_1 = arith.constant 0 : i32
    return %c0_i32, %c0_i32_0 : i32, i32
  }
  func.func @transform_2(%arg0: i32) -> (i32, i32) {
    %c0_i32 = arith.constant 0 : i32
    %c0_i32_0 = arith.constant 0 : i32
    %c0_i32_1 = arith.constant 0 : i32
    return %c0_i32, %c0_i32_0 : i32, i32
  }
  func.func @transform_3(%arg0: i32) -> (i32, i32) {
    %c0_i32 = arith.constant 0 : i32
    %c0_i32_0 = arith.constant 0 : i32
    %c0_i32_1 = arith.constant 0 : i32
    return %c0_i32, %c0_i32_0 : i32, i32
  }
  func.func @transform_4(%arg0: i32) -> (i32, i32) {
    %c0_i32 = arith.constant 0 : i32
    %c0_i32_0 = arith.constant 0 : i32
    %c0_i32_1 = arith.constant 0 : i32
    return %c0_i32, %c0_i32_0 : i32, i32
  }
  func.func @transform_5(%arg0: i32) -> (i32, i32, i32) {
    %c0_i32 = arith.constant 0 : i32
    %c0_i32_0 = arith.constant 0 : i32
    %c0_i32_1 = arith.constant 0 : i32
    return %arg0, %c0_i32, %c0_i32_0 : i32, i32, i32
  }
}

</mosaic_0001>

<llo_original>
// kernel: geometric_structure_embedding.1
$region0: #{geometric_structure_embedding.1}
  #allocation0 [shape = 'u32[]', space=smem, size = 0x4, offset = 0x4, fixed_abs, tag = 'smem constant byte address 0x4 - core index']
  #allocation1 [shape = 'u32[144,128]{1,0:T(1,128)}', space=vmem, size = 0x12000, scoped, tag = 'internal scratch']
  #allocation2 [shape = 'bf16[32,512]{1,0:T(16,128)(2,1)}', space=vmem, size = 0x8000, scoped, tag = 'scratch operand']
  %s0 = inlined_call_operand.vmem [shape: f32[4,128], index: 0, kind: input, shape index: {}]
  %s1 = inlined_call_operand.vmem [shape: f32[16,1], index: 1, kind: input, shape index: {}]
  %s2 = inlined_call_operand.vmem [shape: bf16[32,32], index: 2, kind: input, shape index: {}]
  %s3 = inlined_call_operand.vmem [shape: bf16[32,32], index: 3, kind: input, shape index: {}]
  %s4 = inlined_call_operand.vmem [shape: f32[32,1], index: 4, kind: input, shape index: {}]
  %s5 = inlined_call_operand.vmem [shape: f32[1,32,128], index: 5, kind: output, shape index: {}]
  %s6 = sld [smem:[#allocation0]]
  $region30: #{geometric_structure_embedding.1} parent=0
    _
  %s8 = ssub.s32 1, %s6
  %s9 = scalar_select 0, %s8, %s6
  // Predicated region
  $region2: #{geometric_structure_embedding.1} parent=0 // pred_check
    _
  $region3: #{geometric_structure_embedding.1} parent=0 // pred_check_branch
    %11 = sbr.rel (0) target = $region5
  $region4: #{geometric_structure_embedding.1} parent=0 // pred_region
    _
  $region5: #{geometric_structure_embedding.1} parent=0 // pred_fallthru
    _
  // Predicated region
  $region6: #{geometric_structure_embedding.1} parent=0 // pred_check
    _
  $region7: #{geometric_structure_embedding.1} parent=0 // pred_check_branch
    %13 = sbr.rel (0) target = $region9
  $region8: #{geometric_structure_embedding.1} parent=0 // pred_region
    _
  $region9: #{geometric_structure_embedding.1} parent=0 // pred_fallthru
    _
  // Predicated region
  $region10: #{geometric_structure_embedding.1} parent=0 // pred_check
    _
  $region11: #{geometric_structure_embedding.1} parent=0 // pred_check_branch
    %15 = sbr.rel (0) target = $region13
  $region12: #{geometric_structure_embedding.1} parent=0 // pred_region
    _
  $region13: #{geometric_structure_embedding.1} parent=0 // pred_fallthru
    _
  // Predicated region
  $region14: #{geometric_structure_embedding.1} parent=0 // pred_check
    _
  $region15: #{geometric_structure_embedding.1} parent=0 // pred_check_branch
    %17 = sbr.rel (0) target = $region17
  $region16: #{geometric_structure_embedding.1} parent=0 // pred_region
    _
  $region17: #{geometric_structure_embedding.1} parent=0 // pred_fallthru
    _
  // Predicated region
  $region18: #{geometric_structure_embedding.1} parent=0 // pred_check
    _
  $region19: #{geometric_structure_embedding.1} parent=0 // pred_check_branch
    %19 = sbr.rel (0) target = $region21
  $region20: #{geometric_structure_embedding.1} parent=0 // pred_region
    _
  $region21: #{geometric_structure_embedding.1} parent=0 // pred_fallthru
    _
  %v21 = vld [vmem:[%s1] sm:$0xff]
  %v22 = vld [vmem:[%s1 + $0x8] sm:$0xff]
  %v23 = vld [vmem:[%s0] sm:$0x1]
  %25 = vset.pattern.permute.xlu0 0
  %26 = vperm.xlu0 %25, %v21
  %v27 = vpop.permute.xlu0 %26
  %30 = vset.pattern.permute.xlu0 0
  %31 = vperm.xlu0 %30, %v22
  %v32 = vpop.permute.xlu0 %31
  %v34 = vlaneseq
  %v35 = vshrl.u32 %v34, 7
  %v36 = vsub.s32 0, %v35
  %v37 = vrot.slane %v23, %v36
  %v38 = vmul.f32 %v27, %v37
  %v39 = vmul.f32 %v32, %v37
  %v40 = vand.u32 2147483647, %v38
  %vm41 = vcmp.le.f32.partialorder %v40, 0.7853982
  %vm42 = vcmp.lt.s32.totalorder %v38, 0
  %v43 = vand.u32 %v38, 2139095040
  %v44 = vshrl.u32 %v43, 23
  %v45 = vsub.s32 %v44, 127
  %v46 = vand.u32 2147483647, %v38
  %v47 = vand.u32 %v46, 8388607
  %v48 = vor.u32 %v47, 8388608
  %v49 = vsub.s32 0, %v48
  %v50 = vadd.s32 %v45, 1
  %vm51 = vcmp.gt.s32.totalorder %v50, 0
  %v52 = vsel %vm51, %v50, 0
  %v53 = vshrl.u32 %v52, 5
  %v54 = vand.u32 %v52, 31
  %v55 = vsub.s32 32, %v54
  %v56 = vshrl.u32 683565275, %v55
  %v57 = vshll.u32 683565275, %v54
  %v58 = vshrl.u32 2475754826, %v55
  %v59 = vor.u32 %v57, %v58
  %v60 = vshll.u32 2475754826, %v54
  %v61 = vshrl.u32 2131351028, %v55
  %v62 = vor.u32 %v60, %v61
  %v63 = vshll.u32 2131351028, %v54
  %v64 = vshrl.u32 2102212464, %v55
  %v65 = vor.u32 %v63, %v64
  %v66 = vshll.u32 2102212464, %v54
  %v67 = vshrl.u32 920167782, %v55
  %v68 = vor.u32 %v66, %v67
  %v69 = vshll.u32 920167782, %v54
  %v70 = vshrl.u32 1326507024, %v55
  %v71 = vor.u32 %v69, %v70
  %vm72 = vcmp.lt.s32.totalorder %v53, 1
  %vm73 = vcmp.lt.s32.totalorder %v53, 2
  %vm74 = vcmp.lt.s32.totalorder %v53, 3
  %vm75 = vcmp.lt.s32.totalorder %v53, 4
  %v76 = vsel %vm72, %v56, %v59
  %v77 = vsel %vm75, %v65, 2102212464
  %v78 = vsel %vm74, %v62, %v77
  %v79 = vsel %vm73, %v76, %v78
  %v80 = vsel %vm72, %v59, %v62
  %v81 = vsel %vm75, %v68, 920167782
  %v82 = vsel %vm74, %v65, %v81
  %v83 = vsel %vm73, %v80, %v82
  %v84 = vsel %vm72, %v62, %v65
  %v85 = vsel %vm75, %v71, 1326507024
  %v86 = vsel %vm74, %v68, %v85
  %v87 = vsel %vm73, %v84, %v86
  %v88 = vshll.u32 %v48, 8
  %v89 = vmul.u32.u64.compose %v88, %v87
  %v90 = vextract.low.u32 %v89
  %v91 = vextract.high.u32 %v89
  %v92 = vmul.u32.u64.compose %v88, %v83
  %v93 = vextract.low.u32 %v92
  %v94 = vextract.high.u32 %v92
  %v95 = vmul.u32 %v88, %v79
  %v96 = vadd.s32 %v91, %v93
  %vm97 = vc.u32 %v91, %v93
  %v98 = vadd.s32 %v94, 1
  %v99 = vsel %vm97, %v98, %v94
  %v100 = vadd.s32 %v95, %v99
  %v101 = vadd.s32 %v100, 536870912
  %v102 = vshrl.u32 %v101, 30
  %v103 = vshll.u32 %v102, 30
  %v104 = vsub.s32 %v100, %v103
  %vm105 = vcmp.lt.s32.totalorder %v104, 0
  %v106 = vsub.s32 0, %v104
  %v107 = vsel %vm105, %v106, %v104
  %v108 = vclz %v107
  %v109 = vsub.s32 %v108, 2
  %vm110 = vcmp.gt.s32.totalorder 0, %v109
  %v111 = vsel %vm110, 0, %v109
  %v112 = vsub.s32 32, %v111
  %v113 = vshll.u32 %v104, %v111
  %v114 = vshrl.u32 %v96, %v112
  %v115 = vor.u32 %v113, %v114
  %v116 = vsub.s32 4294967266, %v111
  %v117 = vadd.s32 %v116, 127
  %v118 = vshll.u32 %v117, 23
  %v119 = vor.u32 4788187, %v118
  %v120 = vand.u32 2147483647, %v119
  %v122 = vcvt.s32.f32 %v115
  %v123 = vmul.f32 %v122, %v120
  %v124 = vxor.u32 %v123, 2147483648
  %v125 = vsel %vm42, %v124, %v123
  %v126 = vsub.s32 4, %v102
  %v127 = vsel %vm42, %v126, %v102
  %v128 = vsel %vm41, %v38, %v125
  %v129 = vsel %vm41, 0, %v127
  %v130 = vcosq.f32.pop %v128
  %v131 = vsinq.f32.pop %v128
  %vm132 = vweird.f32 %v38
  %v133 = vadd.s32 %v129, 3
  %v134 = vand.u32 %v133, 3
  %vm135 = vcmp.lt.s32.totalorder %v134, 2
  %vm136 = vcmp.eq.s32.totalorder %v134, 0
  %v137 = vxor.u32 %v131, 2147483648
  %v138 = vsel %vm136, %v130, %v137
  %vm139 = vcmp.eq.s32.totalorder %v134, 2
  %v140 = vxor.u32 %v130, 2147483648
  %v141 = vsel %vm139, %v140, %v131
  %v142 = vsel %vm135, %v138, %v141
  %v143 = vsel %vm132, nan, %v142
  %v144 = vand.u32 2147483647, %v39
  %vm145 = vcmp.le.f32.partialorder %v144, 0.7853982
  %vm146 = vcmp.lt.s32.totalorder %v39, 0
  %v147 = vand.u32 %v39, 2139095040
  %v148 = vshrl.u32 %v147, 23
  %v149 = vsub.s32 %v148, 127
  %v150 = vand.u32 2147483647, %v39
  %v151 = vand.u32 %v150, 8388607
  %v152 = vor.u32 %v151, 8388608
  %v153 = vsub.s32 0, %v152
  %v154 = vadd.s32 %v149, 1
  %vm155 = vcmp.gt.s32.totalorder %v154, 0
  %v156 = vsel %vm155, %v154, 0
  %v157 = vshrl.u32 %v156, 5
  %v158 = vand.u32 %v156, 31
  %v159 = vsub.s32 32, %v158
  %v160 = vshrl.u32 683565275, %v159
  %v161 = vshll.u32 683565275, %v158
  %v162 = vshrl.u32 2475754826, %v159
  %v163 = vor.u32 %v161, %v162
  %v164 = vshll.u32 2475754826, %v158
  %v165 = vshrl.u32 2131351028, %v159
  %v166 = vor.u32 %v164, %v165
  %v167 = vshll.u32 2131351028, %v158
  %v168 = vshrl.u32 2102212464, %v159
  %v169 = vor.u32 %v167, %v168
  %v170 = vshll.u32 2102212464, %v158
  %v171 = vshrl.u32 920167782, %v159
  %v172 = vor.u32 %v170, %v171
  %v173 = vshll.u32 920167782, %v158
  %v174 = vshrl.u32 1326507024, %v159
  %v175 = vor.u32 %v173, %v174
  %vm176 = vcmp.lt.s32.totalorder %v157, 1
  %vm177 = vcmp.lt.s32.totalorder %v157, 2
  %vm178 = vcmp.lt.s32.totalorder %v157, 3
  %vm179 = vcmp.lt.s32.totalorder %v157, 4
  %v180 = vsel %vm176, %v160, %v163
  %v181 = vsel %vm179, %v169, 2102212464
  %v182 = vsel %vm178, %v166, %v181
  %v183 = vsel %vm177, %v180, %v182
  %v184 = vsel %vm176, %v163, %v166
  %v185 = vsel %vm179, %v172, 920167782
  %v186 = vsel %vm178, %v169, %v185
  %v187 = vsel %vm177, %v184, %v186
  %v188 = vsel %vm176, %v166, %v169
  %v189 = vsel %vm179, %v175, 1326507024
  %v190 = vsel %vm178, %v172, %v189
  %v191 = vsel %vm177, %v188, %v190
  %v192 = vshll.u32 %v152, 8
  %v193 = vmul.u32.u64.compose %v192, %v191
  %v194 = vextract.low.u32 %v193
  %v195 = vextract.high.u32 %v193
  %v196 = vmul.u32.u64.compose %v192, %v187
  %v197 = vextract.low.u32 %v196
  %v198 = vextract.high.u32 %v196
  %v199 = vmul.u32 %v192, %v183
  %v200 = vadd.s32 %v195, %v197
  %vm201 = vc.u32 %v195, %v197
  %v202 = vadd.s32 %v198, 1
  %v203 = vsel %vm201, %v202, %v198
  %v204 = vadd.s32 %v199, %v203
  %v205 = vadd.s32 %v204, 536870912
  %v206 = vshrl.u32 %v205, 30
  %v207 = vshll.u32 %v206, 30
  %v208 = vsub.s32 %v204, %v207
  %vm209 = vcmp.lt.s32.totalorder %v208, 0
  %v210 = vsub.s32 0, %v208
  %v211 = vsel %vm209, %v210, %v208
  %v212 = vclz %v211
  %v213 = vsub.s32 %v212, 2
  %vm214 = vcmp.gt.s32.totalorder 0, %v213
  %v215 = vsel %vm214, 0, %v213
  %v216 = vsub.s32 32, %v215
  %v217 = vshll.u32 %v208, %v215
  %v218 = vshrl.u32 %v200, %v216
  %v219 = vor.u32 %v217, %v218
  %v220 = vsub.s32 4294967266, %v215
  %v221 = vadd.s32 %v220, 127
  %v222 = vshll.u32 %v221, 23
  %v223 = vor.u32 4788187, %v222
  %v224 = vand.u32 2147483647, %v223
  %v226 = vcvt.s32.f32 %v219
  %v227 = vmul.f32 %v226, %v224
  %v228 = vxor.u32 %v227, 2147483648
  %v229 = vsel %vm146, %v228, %v227
  %v230 = vsub.s32 4, %v206
  %v231 = vsel %vm146, %v230, %v206
  %v232 = vsel %vm145, %v39, %v229
  %v233 = vsel %vm145, 0, %v231
  %v234 = vcosq.f32.pop %v232
  %v235 = vsinq.f32.pop %v232
  %vm236 = vweird.f32 %v39
  %v237 = vadd.s32 %v233, 3
  %v238 = vand.u32 %v237, 3
  %vm239 = vcmp.lt.s32.totalorder %v238, 2
  %vm240 = vcmp.eq.s32.totalorder %v238, 0
  %v241 = vxor.u32 %v235, 2147483648
  %v242 = vsel %vm240, %v234, %v241
  %vm243 = vcmp.eq.s32.totalorder %v238, 2
  %v244 = vxor.u32 %v234, 2147483648
  %v245 = vsel %vm243, %v244, %v235
  %v246 = vsel %vm239, %v242, %v245
  %v247 = vsel %vm236, nan, %v246
  %v248 = vpack.c.bf16 %v247, %v143
  %249 = vst [vmem:[#allocation2] sm:$0xff] %v248
  %v250 = vand.u32 2147483647, %v38
  %vm251 = vcmp.le.f32.partialorder %v250, 0.7853982
  %vm252 = vcmp.lt.s32.totalorder %v38, 0
  %v253 = vand.u32 %v38, 2139095040
  %v254 = vshrl.u32 %v253, 23
  %v255 = vsub.s32 %v254, 127
  %v256 = vand.u32 2147483647, %v38
  %v257 = vand.u32 %v256, 8388607
  %v258 = vor.u32 %v257, 8388608
  %v259 = vsub.s32 0, %v258
  %v260 = vadd.s32 %v255, 1
  %vm261 = vcmp.gt.s32.totalorder %v260, 0
  %v262 = vsel %vm261, %v260, 0
  %v263 = vshrl.u32 %v262, 5
  %v264 = vand.u32 %v262, 31
  %v265 = vsub.s32 32, %v264
  %v266 = vshrl.u32 683565275, %v265
  %v267 = vshll.u32 683565275, %v264
  %v268 = vshrl.u32 2475754826, %v265
  %v269 = vor.u32 %v267, %v268
  %v270 = vshll.u32 2475754826, %v264
  %v271 = vshrl.u32 2131351028, %v265
  %v272 = vor.u32 %v270, %v271
  %v273 = vshll.u32 2131351028, %v264
  %v274 = vshrl.u32 2102212464, %v265
  %v275 = vor.u32 %v273, %v274
  %v276 = vshll.u32 2102212464, %v264
  %v277 = vshrl.u32 920167782, %v265
  %v278 = vor.u32 %v276, %v277
  %v279 = vshll.u32 920167782, %v264
  %v280 = vshrl.u32 1326507024, %v265
  %v281 = vor.u32 %v279, %v280
  %vm282 = vcmp.lt.s32.totalorder %v263, 1
  %vm283 = vcmp.lt.s32.totalorder %v263, 2
  %vm284 = vcmp.lt.s32.totalorder %v263, 3
  %vm285 = vcmp.lt.s32.totalorder %v263, 4
  %v286 = vsel %vm282, %v266, %v269
  %v287 = vsel %vm285, %v275, 2102212464
  %v288 = vsel %vm284, %v272, %v287
  %v289 = vsel %vm283, %v286, %v288
  %v290 = vsel %vm282, %v269, %v272
  %v291 = vsel %vm285, %v278, 920167782
  %v292 = vsel %vm284, %v275, %v291
  %v293 = vsel %vm283, %v290, %v292
  %v294 = vsel %vm282, %v272, %v275
  %v295 = vsel %vm285, %v281, 1326507024
  %v296 = vsel %vm284, %v278, %v295
  %v297 = vsel %vm283, %v294, %v296
  %v298 = vshll.u32 %v258, 8
  %v299 = vmul.u32.u64.compose %v298, %v297
  %v300 = vextract.low.u32 %v299
  %v301 = vextract.high.u32 %v299
  %v302 = vmul.u32.u64.compose %v298, %v293
  %v303 = vextract.low.u32 %v302
  %v304 = vextract.high.u32 %v302
  %v305 = vmul.u32 %v298, %v289
  %v306 = vadd.s32 %v301, %v303
  %vm307 = vc.u32 %v301, %v303
  %v308 = vadd.s32 %v304, 1
  %v309 = vsel %vm307, %v308, %v304
  %v310 = vadd.s32 %v305, %v309
  %v311 = vadd.s32 %v310, 536870912
  %v312 = vshrl.u32 %v311, 30
  %v313 = vshll.u32 %v312, 30
  %v314 = vsub.s32 %v310, %v313
  %vm315 = vcmp.lt.s32.totalorder %v314, 0
  %v316 = vsub.s32 0, %v314
  %v317 = vsel %vm315, %v316, %v314
  %v318 = vclz %v317
  %v319 = vsub.s32 %v318, 2
  %vm320 = vcmp.gt.s32.totalorder 0, %v319
  %v321 = vsel %vm320, 0, %v319
  %v322 = vsub.s32 32, %v321
  %v323 = vshll.u32 %v314, %v321
  %v324 = vshrl.u32 %v306, %v322
  %v325 = vor.u32 %v323, %v324
  %v326 = vsub.s32 4294967266, %v321
  %v327 = vadd.s32 %v326, 127
  %v328 = vshll.u32 %v327, 23
  %v329 = vor.u32 4788187, %v328
  %v330 = vand.u32 2147483647, %v329
  %v332 = vcvt.s32.f32 %v325
  %v333 = vmul.f32 %v332, %v330
  %v334 = vxor.u32 %v333, 2147483648
  %v335 = vsel %vm252, %v334, %v333
  %v336 = vsub.s32 4, %v312
  %v337 = vsel %vm252, %v336, %v312
  %v338 = vsel %vm251, %v38, %v335
  %v339 = vsel %vm251, 0, %v337
  %v340 = vcosq.f32.pop %v338
  %v341 = vsinq.f32.pop %v338
  %vm342 = vweird.f32 %v38
  %v343 = vand.u32 %v339, 3
  %vm344 = vcmp.lt.s32.totalorder %v343, 2
  %vm345 = vcmp.eq.s32.totalorder %v343, 0
  %v346 = vxor.u32 %v341, 2147483648
  %v347 = vsel %vm345, %v340, %v346
  %vm348 = vcmp.eq.s32.totalorder %v343, 2
  %v349 = vxor.u32 %v340, 2147483648
  %v350 = vsel %vm348, %v349, %v341
  %v351 = vsel %vm344, %v347, %v350
  %v352 = vsel %vm342, nan, %v351
  %v353 = vand.u32 2147483647, %v39
  %vm354 = vcmp.le.f32.partialorder %v353, 0.7853982
  %vm355 = vcmp.lt.s32.totalorder %v39, 0
  %v356 = vand.u32 %v39, 2139095040
  %v357 = vshrl.u32 %v356, 23
  %v358 = vsub.s32 %v357, 127
  %v359 = vand.u32 2147483647, %v39
  %v360 = vand.u32 %v359, 8388607
  %v361 = vor.u32 %v360, 8388608
  %v362 = vsub.s32 0, %v361
  %v363 = vadd.s32 %v358, 1
  %vm364 = vcmp.gt.s32.totalorder %v363, 0
  %v365 = vsel %vm364, %v363, 0
  %v366 = vshrl.u32 %v365, 5
  %v367 = vand.u32 %v365, 31
  %v368 = vsub.s32 32, %v367
  %v369 = vshrl.u32 683565275, %v368
  %v370 = vshll.u32 683565275, %v367
  %v371 = vshrl.u32 2475754826, %v368
  %v372 = vor.u32 %v370, %v371
  %v373 = vshll.u32 2475754826, %v367
  %v374 = vshrl.u32 2131351028, %v368
  %v375 = vor.u32 %v373, %v374
  %v376 = vshll.u32 2131351028, %v367
  %v377 = vshrl.u32 2102212464, %v368
  %v378 = vor.u32 %v376, %v377
  %v379 = vshll.u32 2102212464, %v367
  %v380 = vshrl.u32 920167782, %v368
  %v381 = vor.u32 %v379, %v380
  %v382 = vshll.u32 920167782, %v367
  %v383 = vshrl.u32 1326507024, %v368
  %v384 = vor.u32 %v382, %v383
  %vm385 = vcmp.lt.s32.totalorder %v366, 1
  %vm386 = vcmp.lt.s32.totalorder %v366, 2
  %vm387 = vcmp.lt.s32.totalorder %v366, 3
  %vm388 = vcmp.lt.s32.totalorder %v366, 4
  %v389 = vsel %vm385, %v369, %v372
  %v390 = vsel %vm388, %v378, 2102212464
  %v391 = vsel %vm387, %v375, %v390
  %v392 = vsel %vm386, %v389, %v391
  %v393 = vsel %vm385, %v372, %v375
  %v394 = vsel %vm388, %v381, 920167782
  %v395 = vsel %vm387, %v378, %v394
  %v396 = vsel %vm386, %v393, %v395
  %v397 = vsel %vm385, %v375, %v378
  %v398 = vsel %vm388, %v384, 1326507024
  %v399 = vsel %vm387, %v381, %v398
  %v400 = vsel %vm386, %v397, %v399
  %v401 = vshll.u32 %v361, 8
  %v402 = vmul.u32.u64.compose %v401, %v400
  %v403 = vextract.low.u32 %v402
  %v404 = vextract.high.u32 %v402
  %v405 = vmul.u32.u64.compose %v401, %v396
  %v406 = vextract.low.u32 %v405
  %v407 = vextract.high.u32 %v405
  %v408 = vmul.u32 %v401, %v392
  %v409 = vadd.s32 %v404, %v406
  %vm410 = vc.u32 %v404, %v406
  %v411 = vadd.s32 %v407, 1
  %v412 = vsel %vm410, %v411, %v407
  %v413 = vadd.s32 %v408, %v412
  %v414 = vadd.s32 %v413, 536870912
  %v415 = vshrl.u32 %v414, 30
  %v416 = vshll.u32 %v415, 30
  %v417 = vsub.s32 %v413, %v416
  %vm418 = vcmp.lt.s32.totalorder %v417, 0
  %v419 = vsub.s32 0, %v417
  %v420 = vsel %vm418, %v419, %v417
  %v421 = vclz %v420
  %v422 = vsub.s32 %v421, 2
  %vm423 = vcmp.gt.s32.totalorder 0, %v422
  %v424 = vsel %vm423, 0, %v422
  %v425 = vsub.s32 32, %v424
  %v426 = vshll.u32 %v417, %v424
  %v427 = vshrl.u32 %v409, %v425
  %v428 = vor.u32 %v426, %v427
  %v429 = vsub.s32 4294967266, %v424
  %v430 = vadd.s32 %v429, 127
  %v431 = vshll.u32 %v430, 23
  %v432 = vor.u32 4788187, %v431
  %v433 = vand.u32 2147483647, %v432
  %v435 = vcvt.s32.f32 %v428
  %v436 = vmul.f32 %v435, %v433
  %v437 = vxor.u32 %v436, 2147483648
  %v438 = vsel %vm355, %v437, %v436
  %v439 = vsub.s32 4, %v415
  %v440 = vsel %vm355, %v439, %v415
  %v441 = vsel %vm354, %v39, %v438
  %v442 = vsel %vm354, 0, %v440
  %v443 = vcosq.f32.pop %v441
  %v444 = vsinq.f32.pop %v441
  %vm445 = vweird.f32 %v39
  %v446 = vand.u32 %v442, 3
  %vm447 = vcmp.lt.s32.totalorder %v446, 2
  %vm448 = vcmp.eq.s32.totalorder %v446, 0
  %v449 = vxor.u32 %v444, 2147483648
  %v450 = vsel %vm448, %v443, %v449
  %vm451 = vcmp.eq.s32.totalorder %v446, 2
  %v452 = vxor.u32 %v443, 2147483648
  %v453 = vsel %vm451, %v452, %v444
  %v454 = vsel %vm447, %v450, %v453
  %v455 = vsel %vm445, nan, %v454
  %v456 = vpack.c.bf16 %v455, %v352
  %457 = vst [vmem:[#allocation2 + $0x20] sm:$0xff] %v456
  %v458 = vld [vmem:[%s0 + $0x1] sm:$0x1]
  %v459 = vlaneseq
  %v460 = vshrl.u32 %v459, 7
  %v461 = vsub.s32 0, %v460
  %v462 = vrot.slane %v458, %v461
  %v463 = vmul.f32 %v27, %v462
  %v464 = vmul.f32 %v32, %v462
  %v465 = vand.u32 2147483647, %v463
  %vm466 = vcmp.le.f32.partialorder %v465, 0.7853982
  %vm467 = vcmp.lt.s32.totalorder %v463, 0
  %v468 = vand.u32 %v463, 2139095040
  %v469 = vshrl.u32 %v468, 23
  %v470 = vsub.s32 %v469, 127
  %v471 = vand.u32 2147483647, %v463
  %v472 = vand.u32 %v471, 8388607
  %v473 = vor.u32 %v472, 8388608
  %v474 = vsub.s32 0, %v473
  %v475 = vadd.s32 %v470, 1
  %vm476 = vcmp.gt.s32.totalorder %v475, 0
  %v477 = vsel %vm476, %v475, 0
  %v478 = vshrl.u32 %v477, 5
  %v479 = vand.u32 %v477, 31
  %v480 = vsub.s32 32, %v479
  %v481 = vshrl.u32 683565275, %v480
  %v482 = vshll.u32 683565275, %v479
  %v483 = vshrl.u32 2475754826, %v480
  %v484 = vor.u32 %v482, %v483
  %v485 = vshll.u32 2475754826, %v479
  %v486 = vshrl.u32 2131351028, %v480
  %v487 = vor.u32 %v485, %v486
  %v488 = vshll.u32 2131351028, %v479
  %v489 = vshrl.u32 2102212464, %v480
  %v490 = vor.u32 %v488, %v489
  %v491 = vshll.u32 2102212464, %v479
  %v492 = vshrl.u32 920167782, %v480
  %v493 = vor.u32 %v491, %v492
  %v494 = vshll.u32 920167782, %v479
  %v495 = vshrl.u32 1326507024, %v480
  %v496 = vor.u32 %v494, %v495
  %vm497 = vcmp.lt.s32.totalorder %v478, 1
  %vm498 = vcmp.lt.s32.totalorder %v478, 2
  %vm499 = vcmp.lt.s32.totalorder %v478, 3
  %vm500 = vcmp.lt.s32.totalorder %v478, 4
  %v501 = vsel %vm497, %v481, %v484
  %v502 = vsel %vm500, %v490, 2102212464
  %v503 = vsel %vm499, %v487, %v502
  %v504 = vsel %vm498, %v501, %v503
  %v505 = vsel %vm497, %v484, %v487
  %v506 = vsel %vm500, %v493, 920167782
  %v507 = vsel %vm499, %v490, %v506
  %v508 = vsel %vm498, %v505, %v507
  %v509 = vsel %vm497, %v487, %v490
  %v510 = vsel %vm500, %v496, 1326507024
  %v511 = vsel %vm499, %v493, %v510
  %v512 = vsel %vm498, %v509, %v511
  %v513 = vshll.u32 %v473, 8
  %v514 = vmul.u32.u64.compose %v513, %v512
  %v515 = vextract.low.u32 %v514
  %v516 = vextract.high.u32 %v514
  %v517 = vmul.u32.u64.compose %v513, %v508
  %v518 = vextract.low.u32 %v517
  %v519 = vextract.high.u32 %v517
  %v520 = vmul.u32 %v513, %v504
  %v521 = vadd.s32 %v516, %v518
  %vm522 = vc.u32 %v516, %v518
  %v523 = vadd.s32 %v519, 1
  %v524 = vsel %vm522, %v523, %v519
  %v525 = vadd.s32 %v520, %v524
  %v526 = vadd.s32 %v525, 536870912
  %v527 = vshrl.u32 %v526, 30
  %v528 = vshll.u32 %v527, 30
  %v529 = vsub.s32 %v525, %v528
  %vm530 = vcmp.lt.s32.totalorder %v529, 0
  %v531 = vsub.s32 0, %v529
  %v532 = vsel %vm530, %v531, %v529
  %v533 = vclz %v532
  %v534 = vsub.s32 %v533, 2
  %vm535 = vcmp.gt.s32.totalorder 0, %v534
  %v536 = vsel %vm535, 0, %v534
  %v537 = vsub.s32 32, %v536
  %v538 = vshll.u32 %v529, %v536
  %v539 = vshrl.u32 %v521, %v537
  %v540 = vor.u32 %v538, %v539
  %v541 = vsub.s32 4294967266, %v536
  %v542 = vadd.s32 %v541, 127
  %v543 = vshll.u32 %v542, 23
  %v544 = vor.u32 4788187, %v543
  %v545 = vand.u32 2147483647, %v544
  %v547 = vcvt.s32.f32 %v540
  %v548 = vmul.f32 %v547, %v545
  %v549 = vxor.u32 %v548, 2147483648
  %v550 = vsel %vm467, %v549, %v548
  %v551 = vsub.s32 4, %v527
  %v552 = vsel %vm467, %v551, %v527
  %v553 = vsel %vm466, %v463, %v550
  %v554 = vsel %vm466, 0, %v552
  %v555 = vcosq.f32.pop %v553
  %v556 = vsinq.f32.pop %v553
  %vm557 = vweird.f32 %v463
  %v558 = vadd.s32 %v554, 3
  %v559 = vand.u32 %v558, 3
  %vm560 = vcmp.lt.s32.totalorder %v559, 2
  %vm561 = vcmp.eq.s32.totalorder %v559, 0
  %v562 = vxor.u32 %v556, 2147483648
  %v563 = vsel %vm561, %v555, %v562
  %vm564 = vcmp.eq.s32.totalorder %v559, 2
  %v565 = vxor.u32 %v555, 2147483648
  %v566 = vsel %vm564, %v565, %v556
  %v567 = vsel %vm560, %v563, %v566
  %v568 = vsel %vm557, nan, %v567
  %v569 = vand.u32 2147483647, %v464
  %vm570 = vcmp.le.f32.partialorder %v569, 0.7853982
  %vm571 = vcmp.lt.s32.totalorder %v464, 0
  %v572 = vand.u32 %v464, 2139095040
  %v573 = vshrl.u32 %v572, 23
  %v574 = vsub.s32 %v573, 127
  %v575 = vand.u32 2147483647, %v464
  %v576 = vand.u32 %v575, 8388607
  %v577 = vor.u32 %v576, 8388608
  %v578 = vsub.s32 0, %v577
  %v579 = vadd.s32 %v574, 1
  %vm580 = vcmp.gt.s32.totalorder %v579, 0
  %v581 = vsel %vm580, %v579, 0
  %v582 = vshrl.u32 %v581, 5
  %v583 = vand.u32 %v581, 31
  %v584 = vsub.s32 32, %v583
  %v585 = vshrl.u32 683565275, %v584
  %v586 = vshll.u32 683565275, %v583
  %v587 = vshrl.u32 2475754826, %v584
  %v588 = vor.u32 %v586, %v587
  %v589 = vshll.u32 2475754826, %v583
  %v590 = vshrl.u32 2131351028, %v584
  %v591 = vor.u32 %v589, %v590
  %v592 = vshll.u32 2131351028, %v583
  %v593 = vshrl.u32 2102212464, %v584
  %v594 = vor.u32 %v592, %v593
  %v595 = vshll.u32 2102212464, %v583
  %v596 = vshrl.u32 920167782, %v584
  %v597 = vor.u32 %v595, %v596
  %v598 = vshll.u32 920167782, %v583
  %v599 = vshrl.u32 1326507024, %v584
  %v600 = vor.u32 %v598, %v599
  %vm601 = vcmp.lt.s32.totalorder %v582, 1
  %vm602 = vcmp.lt.s32.totalorder %v582, 2
  %vm603 = vcmp.lt.s32.totalorder %v582, 3
  %vm604 = vcmp.lt.s32.totalorder %v582, 4
  %v605 = vsel %vm601, %v585, %v588
  %v606 = vsel %vm604, %v594, 2102212464
  %v607 = vsel %vm603, %v591, %v606
  %v608 = vsel %vm602, %v605, %v607
  %v609 = vsel %vm601, %v588, %v591
  %v610 = vsel %vm604, %v597, 920167782
  %v611 = vsel %vm603, %v594, %v610
  %v612 = vsel %vm602, %v609, %v611
  %v613 = vsel %vm601, %v591, %v594
  %v614 = vsel %vm604, %v600, 1326507024
  %v615 = vsel %vm603, %v597, %v614
  %v616 = vsel %vm602, %v613, %v615
  %v617 = vshll.u32 %v577, 8
  %v618 = vmul.u32.u64.compose %v617, %v616
  %v619 = vextract.low.u32 %v618
  %v620 = vextract.high.u32 %v618
  %v621 = vmul.u32.u64.compose %v617, %v612
  %v622 = vextract.low.u32 %v621
  %v623 = vextract.high.u32 %v621
  %v624 = vmul.u32 %v617, %v608
  %v625 = vadd.s32 %v620, %v622
  %vm626 = vc.u32 %v620, %v622
  %v627 = vadd.s32 %v623, 1
  %v628 = vsel %vm626, %v627, %v623
  %v629 = vadd.s32 %v624, %v628
  %v630 = vadd.s32 %v629, 536870912
  %v631 = vshrl.u32 %v630, 30
  %v632 = vshll.u32 %v631, 30
  %v633 = vsub.s32 %v629, %v632
  %vm634 = vcmp.lt.s32.totalorder %v633, 0
  %v635 = vsub.s32 0, %v633
  %v636 = vsel %vm634, %v635, %v633
  %v637 = vclz %v636
  %v638 = vsub.s32 %v637, 2
  %vm639 = vcmp.gt.s32.totalorder 0, %v638
  %v640 = vsel %vm639, 0, %v638
  %v641 = vsub.s32 32, %v640
  %v642 = vshll.u32 %v633, %v640
  %v643 = vshrl.u32 %v625, %v641
  %v644 = vor.u32 %v642, %v643
  %v645 = vsub.s32 4294967266, %v640
  %v646 = vadd.s32 %v645, 127
  %v647 = vshll.u32 %v646, 23
  %v648 = vor.u32 4788187, %v647
  %v649 = vand.u32 2147483647, %v648
  %v651 = vcvt.s32.f32 %v644
  %v652 = vmul.f32 %v651, %v649
  %v653 = vxor.u32 %v652, 2147483648
  %v654 = vsel %vm571, %v653, %v652
  %v655 = vsub.s32 4, %v631
  %v656 = vsel %vm571, %v655, %v631
  %v657 = vsel %vm570, %v464, %v654
  %v658 = vsel %vm570, 0, %v656
  %v659 = vcosq.f32.pop %v657
  %v660 = vsinq.f32.pop %v657
  %vm661 = vweird.f32 %v464
  %v662 = vadd.s32 %v658, 3
  %v663 = vand.u32 %v662, 3
  %vm664 = vcmp.lt.s32.totalorder %v663, 2
  %vm665 = vcmp.eq.s32.totalorder %v663, 0
  %v666 = vxor.u32 %v660, 2147483648
  %v667 = vsel %vm665, %v659, %v666
  %vm668 = vcmp.eq.s32.totalorder %v663, 2
  %v669 = vxor.u32 %v659, 2147483648
  %v670 = vsel %vm668, %v669, %v660
  %v671 = vsel %vm664, %v667, %v670
  %v672 = vsel %vm661, nan, %v671
  %v673 = vpack.c.bf16 %v672, %v568
  %674 = vst [vmem:[#allocation2 + $0x8] sm:$0xff] %v673
  %v675 = vand.u32 2147483647, %v463
  %vm676 = vcmp.le.f32.partialorder %v675, 0.7853982
  %vm677 = vcmp.lt.s32.totalorder %v463, 0
  %v678 = vand.u32 %v463, 2139095040
  %v679 = vshrl.u32 %v678, 23
  %v680 = vsub.s32 %v679, 127
  %v681 = vand.u32 2147483647, %v463
  %v682 = vand.u32 %v681, 8388607
  %v683 = vor.u32 %v682, 8388608
  %v684 = vsub.s32 0, %v683
  %v685 = vadd.s32 %v680, 1
  %vm686 = vcmp.gt.s32.totalorder %v685, 0
  %v687 = vsel %vm686, %v685, 0
  %v688 = vshrl.u32 %v687, 5
  %v689 = vand.u32 %v687, 31
  %v690 = vsub.s32 32, %v689
  %v691 = vshrl.u32 683565275, %v690
  %v692 = vshll.u32 683565275, %v689
  %v693 = vshrl.u32 2475754826, %v690
  %v694 = vor.u32 %v692, %v693
  %v695 = vshll.u32 2475754826, %v689
  %v696 = vshrl.u32 2131351028, %v690
  %v697 = vor.u32 %v695, %v696
  %v698 = vshll.u32 2131351028, %v689
  %v699 = vshrl.u32 2102212464, %v690
  %v700 = vor.u32 %v698, %v699
  %v701 = vshll.u32 2102212464, %v689
  %v702 = vshrl.u32 920167782, %v690
  %v703 = vor.u32 %v701, %v702
  %v704 = vshll.u32 920167782, %v689
  %v705 = vshrl.u32 1326507024, %v690
  %v706 = vor.u32 %v704, %v705
  %vm707 = vcmp.lt.s32.totalorder %v688, 1
  %vm708 = vcmp.lt.s32.totalorder %v688, 2
  %vm709 = vcmp.lt.s32.totalorder %v688, 3
  %vm710 = vcmp.lt.s32.totalorder %v688, 4
  %v711 = vsel %vm707, %v691, %v694
  %v712 = vsel %vm710, %v700, 2102212464
  %v713 = vsel %vm709, %v697, %v712
  %v714 = vsel %vm708, %v711, %v713
  %v715 = vsel %vm707, %v694, %v697
  %v716 = vsel %vm710, %v703, 920167782
  %v717 = vsel %vm709, %v700, %v716
  %v718 = vsel %vm708, %v715, %v717
  %v719 = vsel %vm707, %v697, %v700
  %v720 = vsel %vm710, %v706, 1326507024
  %v721 = vsel %vm709, %v703, %v720
  %v722 = vsel %vm708, %v719, %v721
  %v723 = vshll.u32 %v683, 8
  %v724 = vmul.u32.u64.compose %v723, %v722
  %v725 = vextract.low.u32 %v724
  %v726 = vextract.high.u32 %v724
  %v727 = vmul.u32.u64.compose %v723, %v718
  %v728 = vextract.low.u32 %v727
  %v729 = vextract.high.u32 %v727
  %v730 = vmul.u32 %v723, %v714
  %v731 = vadd.s32 %v726, %v728
  %vm732 = vc.u32 %v726, %v728
  %v733 = vadd.s32 %v729, 1
  %v734 = vsel %vm732, %v733, %v729
  %v735 = vadd.s32 %v730, %v734
  %v736 = vadd.s32 %v735, 536870912
  %v737 = vshrl.u32 %v736, 30
  %v738 = vshll.u32 %v737, 30
  %v739 = vsub.s32 %v735, %v738
  %vm740 = vcmp.lt.s32.totalorder %v739, 0
  %v741 = vsub.s32 0, %v739
  %v742 = vsel %vm740, %v741, %v739
  %v743 = vclz %v742
  %v744 = vsub.s32 %v743, 2
  %vm745 = vcmp.gt.s32.totalorder 0, %v744
  %v746 = vsel %vm745, 0, %v744
  %v747 = vsub.s32 32, %v746
  %v748 = vshll.u32 %v739, %v746
  %v749 = vshrl.u32 %v731, %v747
  %v750 = vor.u32 %v748, %v749
  %v751 = vsub.s32 4294967266, %v746
  %v752 = vadd.s32 %v751, 127
  %v753 = vshll.u32 %v752, 23
  %v754 = vor.u32 4788187, %v753
  %v755 = vand.u32 2147483647, %v754
  %v757 = vcvt.s32.f32 %v750
  %v758 = vmul.f32 %v757, %v755
  %v759 = vxor.u32 %v758, 2147483648
  %v760 = vsel %vm677, %v759, %v758
  %v761 = vsub.s32 4, %v737
  %v762 = vsel %vm677, %v761, %v737
  %v763 = vsel %vm676, %v463, %v760
  %v764 = vsel %vm676, 0, %v762
  %v765 = vcosq.f32.pop %v763
  %v766 = vsinq.f32.pop %v763
  %vm767 = vweird.f32 %v463
  %v768 = vand.u32 %v764, 3
  %vm769 = vcmp.lt.s32.totalorder %v768, 2
  %vm770 = vcmp.eq.s32.totalorder %v768, 0
  %v771 = vxor.u32 %v766, 2147483648
  %v772 = vsel %vm770, %v765, %v771
  %vm773 = vcmp.eq.s32.totalorder %v768, 2
  %v774 = vxor.u32 %v765, 2147483648
  %v775 = vsel %vm773, %v774, %v766
  %v776 = vsel %vm769, %v772, %v775
  %v777 = vsel %vm767, nan, %v776
  %v778 = vand.u32 2147483647, %v464
  %vm779 = vcmp.le.f32.partialorder %v778, 0.7853982
  %vm780 = vcmp.lt.s32.totalorder %v464, 0
  %v781 = vand.u32 %v464, 2139095040
  %v782 = vshrl.u32 %v781, 23
  %v783 = vsub.s32 %v782, 127
  %v784 = vand.u32 2147483647, %v464
  %v785 = vand.u32 %v784, 8388607
  %v786 = vor.u32 %v785, 8388608
  %v787 = vsub.s32 0, %v786
  %v788 = vadd.s32 %v783, 1
  %vm789 = vcmp.gt.s32.totalorder %v788, 0
  %v790 = vsel %vm789, %v788, 0
  %v791 = vshrl.u32 %v790, 5
  %v792 = vand.u32 %v790, 31
  %v793 = vsub.s32 32, %v792
  %v794 = vshrl.u32 683565275, %v793
  %v795 = vshll.u32 683565275, %v792
  %v796 = vshrl.u32 2475754826, %v793
  %v797 = vor.u32 %v795, %v796
  %v798 = vshll.u32 2475754826, %v792
  %v799 = vshrl.u32 2131351028, %v793
  %v800 = vor.u32 %v798, %v799
  %v801 = vshll.u32 2131351028, %v792
  %v802 = vshrl.u32 2102212464, %v793
  %v803 = vor.u32 %v801, %v802
  %v804 = vshll.u32 2102212464, %v792
  %v805 = vshrl.u32 920167782, %v793
  %v806 = vor.u32 %v804, %v805
  %v807 = vshll.u32 920167782, %v792
  %v808 = vshrl.u32 1326507024, %v793
  %v809 = vor.u32 %v807, %v808
  %vm810 = vcmp.lt.s32.totalorder %v791, 1
  %vm811 = vcmp.lt.s32.totalorder %v791, 2
  %vm812 = vcmp.lt.s32.totalorder %v791, 3
  %vm813 = vcmp.lt.s32.totalorder %v791, 4
  %v814 = vsel %vm810, %v794, %v797
  %v815 = vsel %vm813, %v803, 2102212464
  %v816 = vsel %vm812, %v800, %v815
  %v817 = vsel %vm811, %v814, %v816
  %v818 = vsel %vm810, %v797, %v800
  %v819 = vsel %vm813, %v806, 920167782
  %v820 = vsel %vm812, %v803, %v819
  %v821 = vsel %vm811, %v818, %v820
  %v822 = vsel %vm810, %v800, %v803
  %v823 = vsel %vm813, %v809, 1326507024
  %v824 = vsel %vm812, %v806, %v823
  %v825 = vsel %vm811, %v822, %v824
  %v826 = vshll.u32 %v786, 8
  %v827 = vmul.u32.u64.compose %v826, %v825
  %v828 = vextract.low.u32 %v827
  %v829 = vextract.high.u32 %v827
  %v830 = vmul.u32.u64.compose %v826, %v821
  %v831 = vextract.low.u32 %v830
  %v832 = vextract.high.u32 %v830
  %v833 = vmul.u32 %v826, %v817
  %v834 = vadd.s32 %v829, %v831
  %vm835 = vc.u32 %v829, %v831
  %v836 = vadd.s32 %v832, 1
  %v837 = vsel %vm835, %v836, %v832
  %v838 = vadd.s32 %v833, %v837
  %v839 = vadd.s32 %v838, 536870912
  %v840 = vshrl.u32 %v839, 30
  %v841 = vshll.u32 %v840, 30
  %v842 = vsub.s32 %v838, %v841
  %vm843 = vcmp.lt.s32.totalorder %v842, 0
  %v844 = vsub.s32 0, %v842
  %v845 = vsel %vm843, %v844, %v842
  %v846 = vclz %v845
  %v847 = vsub.s32 %v846, 2
  %vm848 = vcmp.gt.s32.totalorder 0, %v847
  %v849 = vsel %vm848, 0, %v847
  %v850 = vsub.s32 32, %v849
  %v851 = vshll.u32 %v842, %v849
  %v852 = vshrl.u32 %v834, %v850
  %v853 = vor.u32 %v851, %v852
  %v854 = vsub.s32 4294967266, %v849
  %v855 = vadd.s32 %v854, 127
  %v856 = vshll.u32 %v855, 23
  %v857 = vor.u32 4788187, %v856
  %v858 = vand.u32 2147483647, %v857
  %v860 = vcvt.s32.f32 %v853
  %v861 = vmul.f32 %v860, %v858
  %v862 = vxor.u32 %v861, 2147483648
  %v863 = vsel %vm780, %v862, %v861
  %v864 = vsub.s32 4, %v840
  %v865 = vsel %vm780, %v864, %v840
  %v866 = vsel %vm779, %v464, %v863
  %v867 = vsel %vm779, 0, %v865
  %v868 = vcosq.f32.pop %v866
  %v869 = vsinq.f32.pop %v866
  %vm870 = vweird.f32 %v464
  %v871 = vand.u32 %v867, 3
  %vm872 = vcmp.lt.s32.totalorder %v871, 2
  %vm873 = vcmp.eq.s32.totalorder %v871, 0
  %v874 = vxor.u32 %v869, 2147483648
  %v875 = vsel %vm873, %v868, %v874
  %vm876 = vcmp.eq.s32.totalorder %v871, 2
  %v877 = vxor.u32 %v868, 2147483648
  %v878 = vsel %vm876, %v877, %v869
  %v879 = vsel %vm872, %v875, %v878
  %v880 = vsel %vm870, nan, %v879
  %v881 = vpack.c.bf16 %v880, %v777
  %882 = vst [vmem:[#allocation2 + $0x28] sm:$0xff] %v881
  %v883 = vld [vmem:[%s0 + $0x2] sm:$0x1]
  %v884 = vlaneseq
  %v885 = vshrl.u32 %v884, 7
  %v886 = vsub.s32 0, %v885
  %v887 = vrot.slane %v883, %v886
  %v888 = vmul.f32 %v27, %v887
  %v889 = vmul.f32 %v32, %v887
  %v890 = vand.u32 2147483647, %v888
  %vm891 = vcmp.le.f32.partialorder %v890, 0.7853982
  %vm892 = vcmp.lt.s32.totalorder %v888, 0
  %v893 = vand.u32 %v888, 2139095040
  %v894 = vshrl.u32 %v893, 23
  %v895 = vsub.s32 %v894, 127
  %v896 = vand.u32 2147483647, %v888
  %v897 = vand.u32 %v896, 8388607
  %v898 = vor.u32 %v897, 8388608
  %v899 = vsub.s32 0, %v898
  %v900 = vadd.s32 %v895, 1
  %vm901 = vcmp.gt.s32.totalorder %v900, 0
  %v902 = vsel %vm901, %v900, 0
  %v903 = vshrl.u32 %v902, 5
  %v904 = vand.u32 %v902, 31
  %v905 = vsub.s32 32, %v904
  %v906 = vshrl.u32 683565275, %v905
  %v907 = vshll.u32 683565275, %v904
  %v908 = vshrl.u32 2475754826, %v905
  %v909 = vor.u32 %v907, %v908
  %v910 = vshll.u32 2475754826, %v904
  %v911 = vshrl.u32 2131351028, %v905
  %v912 = vor.u32 %v910, %v911
  %v913 = vshll.u32 2131351028, %v904
  %v914 = vshrl.u32 2102212464, %v905
  %v915 = vor.u32 %v913, %v914
  %v916 = vshll.u32 2102212464, %v904
  %v917 = vshrl.u32 920167782, %v905
  %v918 = vor.u32 %v916, %v917
  %v919 = vshll.u32 920167782, %v904
  %v920 = vshrl.u32 1326507024, %v905
  %v921 = vor.u32 %v919, %v920
  %vm922 = vcmp.lt.s32.totalorder %v903, 1
  %vm923 = vcmp.lt.s32.totalorder %v903, 2
  %vm924 = vcmp.lt.s32.totalorder %v903, 3
  %vm925 = vcmp.lt.s32.totalorder %v903, 4
  %v926 = vsel %vm922, %v906, %v909
  %v927 = vsel %vm925, %v915, 2102212464
  %v928 = vsel %vm924, %v912, %v927
  %v929 = vsel %vm923, %v926, %v928
  %v930 = vsel %vm922, %v909, %v912
  %v931 = vsel %vm925, %v918, 920167782
  %v932 = vsel %vm924, %v915, %v931
  %v933 = vsel %vm923, %v930, %v932
  %v934 = vsel %vm922, %v912, %v915
  %v935 = vsel %vm925, %v921, 1326507024
  %v936 = vsel %vm924, %v918, %v935
  %v937 = vsel %vm923, %v934, %v936
  %v938 = vshll.u32 %v898, 8
  %v939 = vmul.u32.u64.compose %v938, %v937
  %v940 = vextract.low.u32 %v939
  %v941 = vextract.high.u32 %v939
  %v942 = vmul.u32.u64.compose %v938, %v933
  %v943 = vextract.low.u32 %v942
  %v944 = vextract.high.u32 %v942
  %v945 = vmul.u32 %v938, %v929
  %v946 = vadd.s32 %v941, %v943
  %vm947 = vc.u32 %v941, %v943
  %v948 = vadd.s32 %v944, 1
  %v949 = vsel %vm947, %v948, %v944
  %v950 = vadd.s32 %v945, %v949
  %v951 = vadd.s32 %v950, 536870912
  %v952 = vshrl.u32 %v951, 30
  %v953 = vshll.u32 %v952, 30
  %v954 = vsub.s32 %v950, %v953
  %vm955 = vcmp.lt.s32.totalorder %v954, 0
  %v956 = vsub.s32 0, %v954
  %v957 = vsel %vm955, %v956, %v954
  %v958 = vclz %v957
  %v959 = vsub.s32 %v958, 2
  %vm960 = vcmp.gt.s32.totalorder 0, %v959
  %v961 = vsel %vm960, 0, %v959
  %v962 = vsub.s32 32, %v961
  %v963 = vshll.u32 %v954, %v961
  %v964 = vshrl.u32 %v946, %v962
  %v965 = vor.u32 %v963, %v964
  %v966 = vsub.s32 4294967266, %v961
  %v967 = vadd.s32 %v966, 127
  %v968 = vshll.u32 %v967, 23
  %v969 = vor.u32 4788187, %v968
  %v970 = vand.u32 2147483647, %v969
  %v972 = vcvt.s32.f32 %v965
  %v973 = vmul.f32 %v972, %v970
  %v974 = vxor.u32 %v973, 2147483648
  %v975 = vsel %vm892, %v974, %v973
  %v976 = vsub.s32 4, %v952
  %v977 = vsel %vm892, %v976, %v952
  %v978 = vsel %vm891, %v888, %v975
  %v979 = vsel %vm891, 0, %v977
  %v980 = vcosq.f32.pop %v978
  %v981 = vsinq.f32.pop %v978
  %vm982 = vweird.f32 %v888
  %v983 = vadd.s32 %v979, 3
  %v984 = vand.u32 %v983, 3
  %vm985 = vcmp.lt.s32.totalorder %v984, 2
  %vm986 = vcmp.eq.s32.totalorder %v984, 0
  %v987 = vxor.u32 %v981, 2147483648
  %v988 = vsel %vm986, %v980, %v987
  %vm989 = vcmp.eq.s32.totalorder %v984, 2
  %v990 = vxor.u32 %v980, 2147483648
  %v991 = vsel %vm989, %v990, %v981
  %v992 = vsel %vm985, %v988, %v991
  %v993 = vsel %vm982, nan, %v992
  %v994 = vand.u32 2147483647, %v889
  %vm995 = vcmp.le.f32.partialorder %v994, 0.7853982
  %vm996 = vcmp.lt.s32.totalorder %v889, 0
  %v997 = vand.u32 %v889, 2139095040
  %v998 = vshrl.u32 %v997, 23
  %v999 = vsub.s32 %v998, 127
  %v1000 = vand.u32 2147483647, %v889
  %v1001 = vand.u32 %v1000, 8388607
  %v1002 = vor.u32 %v1001, 8388608
  %v1003 = vsub.s32 0, %v1002
  %v1004 = vadd.s32 %v999, 1
  %vm1005 = vcmp.gt.s32.totalorder %v1004, 0
  %v1006 = vsel %vm1005, %v1004, 0
  %v1007 = vshrl.u32 %v1006, 5
  %v1008 = vand.u32 %v1006, 31
  %v1009 = vsub.s32 32, %v1008
  %v1010 = vshrl.u32 683565275, %v1009
  %v1011 = vshll.u32 683565275, %v1008
  %v1012 = vshrl.u32 2475754826, %v1009
  %v1013 = vor.u32 %v1011, %v1012
  %v1014 = vshll.u32 2475754826, %v1008
  %v1015 = vshrl.u32 2131351028, %v1009
  %v1016 = vor.u32 %v1014, %v1015
  %v1017 = vshll.u32 2131351028, %v1008
  %v1018 = vshrl.u32 2102212464, %v1009
  %v1019 = vor.u32 %v1017, %v1018
  %v1020 = vshll.u32 2102212464, %v1008
  %v1021 = vshrl.u32 920167782, %v1009
  %v1022 = vor.u32 %v1020, %v1021
  %v1023 = vshll.u32 920167782, %v1008
  %v1024 = vshrl.u32 1326507024, %v1009
  %v1025 = vor.u32 %v1023, %v1024
  %vm1026 = vcmp.lt.s32.totalorder %v1007, 1
  %vm1027 = vcmp.lt.s32.totalorder %v1007, 2
  %vm1028 = vcmp.lt.s32.totalorder %v1007, 3
  %vm1029 = vcmp.lt.s32.totalorder %v1007, 4
  %v1030 = vsel %vm1026, %v1010, %v1013
  %v1031 = vsel %vm1029, %v1019, 2102212464
  %v1032 = vsel %vm1028, %v1016, %v1031
  %v1033 = vsel %vm1027, %v1030, %v1032
  %v1034 = vsel %vm1026, %v1013, %v1016
  %v1035 = vsel %vm1029, %v1022, 920167782
  %v1036 = vsel %vm1028, %v1019, %v1035
  %v1037 = vsel %vm1027, %v1034, %v1036
  %v1038 = vsel %vm1026, %v1016, %v1019
  %v1039 = vsel %vm1029, %v1025, 1326507024
  %v1040 = vsel %vm1028, %v1022, %v1039
  %v1041 = vsel %vm1027, %v1038, %v1040
  %v1042 = vshll.u32 %v1002, 8
  %v1043 = vmul.u32.u64.compose %v1042, %v1041
  %v1044 = vextract.low.u32 %v1043
  %v1045 = vextract.high.u32 %v1043
  %v1046 = vmul.u32.u64.compose %v1042, %v1037
  %v1047 = vextract.low.u32 %v1046
  %v1048 = vextract.high.u32 %v1046
  %v1049 = vmul.u32 %v1042, %v1033
  %v1050 = vadd.s32 %v1045, %v1047
  %vm1051 = vc.u32 %v1045, %v1047
  %v1052 = vadd.s32 %v1048, 1
  %v1053 = vsel %vm1051, %v1052, %v1048
  %v1054 = vadd.s32 %v1049, %v1053
  %v1055 = vadd.s32 %v1054, 536870912
  %v1056 = vshrl.u32 %v1055, 30
  %v1057 = vshll.u32 %v1056, 30
  %v1058 = vsub.s32 %v1054, %v1057
  %vm1059 = vcmp.lt.s32.totalorder %v1058, 0
  %v1060 = vsub.s32 0, %v1058
  %v1061 = vsel %vm1059, %v1060, %v1058
  %v1062 = vclz %v1061
  %v1063 = vsub.s32 %v1062, 2
  %vm1064 = vcmp.gt.s32.totalorder 0, %v1063
  %v1065 = vsel %vm1064, 0, %v1063
  %v1066 = vsub.s32 32, %v1065
  %v1067 = vshll.u32 %v1058, %v1065
  %v1068 = vshrl.u32 %v1050, %v1066
  %v1069 = vor.u32 %v1067, %v1068
  %v1070 = vsub.s32 4294967266, %v1065
  %v1071 = vadd.s32 %v1070, 127
  %v1072 = vshll.u32 %v1071, 23
  %v1073 = vor.u32 4788187, %v1072
  %v1074 = vand.u32 2147483647, %v1073
  %v1076 = vcvt.s32.f32 %v1069
  %v1077 = vmul.f32 %v1076, %v1074
  %v1078 = vxor.u32 %v1077, 2147483648
  %v1079 = vsel %vm996, %v1078, %v1077
  %v1080 = vsub.s32 4, %v1056
  %v1081 = vsel %vm996, %v1080, %v1056
  %v1082 = vsel %vm995, %v889, %v1079
  %v1083 = vsel %vm995, 0, %v1081
  %v1084 = vcosq.f32.pop %v1082
  %v1085 = vsinq.f32.pop %v1082
  %vm1086 = vweird.f32 %v889
  %v1087 = vadd.s32 %v1083, 3
  %v1088 = vand.u32 %v1087, 3
  %vm1089 = vcmp.lt.s32.totalorder %v1088, 2
  %vm1090 = vcmp.eq.s32.totalorder %v1088, 0
  %v1091 = vxor.u32 %v1085, 2147483648
  %v1092 = vsel %vm1090, %v1084, %v1091
  %vm1093 = vcmp.eq.s32.totalorder %v1088, 2
  %v1094 = vxor.u32 %v1084, 2147483648
  %v1095 = vsel %vm1093, %v1094, %v1085
  %v1096 = vsel %vm1089, %v1092, %v1095
  %v1097 = vsel %vm1086, nan, %v1096
  %v1098 = vpack.c.bf16 %v1097, %v993
  %1099 = vst [vmem:[#allocation2 + $0x10] sm:$0xff] %v1098
  %v1100 = vand.u32 2147483647, %v888
  %vm1101 = vcmp.le.f32.partialorder %v1100, 0.7853982
  %vm1102 = vcmp.lt.s32.totalorder %v888, 0
  %v1103 = vand.u32 %v888, 2139095040
  %v1104 = vshrl.u32 %v1103, 23
  %v1105 = vsub.s32 %v1104, 127
  %v1106 = vand.u32 2147483647, %v888
  %v1107 = vand.u32 %v1106, 8388607
  %v1108 = vor.u32 %v1107, 8388608
  %v1109 = vsub.s32 0, %v1108
  %v1110 = vadd.s32 %v1105, 1
  %vm1111 = vcmp.gt.s32.totalorder %v1110, 0
  %v1112 = vsel %vm1111, %v1110, 0
  %v1113 = vshrl.u32 %v1112, 5
  %v1114 = vand.u32 %v1112, 31
  %v1115 = vsub.s32 32, %v1114
  %v1116 = vshrl.u32 683565275, %v1115
  %v1117 = vshll.u32 683565275, %v1114
  %v1118 = vshrl.u32 2475754826, %v1115
  %v1119 = vor.u32 %v1117, %v1118
  %v1120 = vshll.u32 2475754826, %v1114
  %v1121 = vshrl.u32 2131351028, %v1115
  %v1122 = vor.u32 %v1120, %v1121
  %v1123 = vshll.u32 2131351028, %v1114
  %v1124 = vshrl.u32 2102212464, %v1115
  %v1125 = vor.u32 %v1123, %v1124
  %v1126 = vshll.u32 2102212464, %v1114
  %v1127 = vshrl.u32 920167782, %v1115
  %v1128 = vor.u32 %v1126, %v1127
  %v1129 = vshll.u32 920167782, %v1114
  %v1130 = vshrl.u32 1326507024, %v1115
  %v1131 = vor.u32 %v1129, %v1130
  %vm1132 = vcmp.lt.s32.totalorder %v1113, 1
  %vm1133 = vcmp.lt.s32.totalorder %v1113, 2
  %vm1134 = vcmp.lt.s32.totalorder %v1113, 3
  %vm1135 = vcmp.lt.s32.totalorder %v1113, 4
  %v1136 = vsel %vm1132, %v1116, %v1119
  %v1137 = vsel %vm1135, %v1125, 2102212464
  %v1138 = vsel %vm1134, %v1122, %v1137
  %v1139 = vsel %vm1133, %v1136, %v1138
  %v1140 = vsel %vm1132, %v1119, %v1122
  %v1141 = vsel %vm1135, %v1128, 920167782
  %v1142 = vsel %vm1134, %v1125, %v1141
  %v1143 = vsel %vm1133, %v1140, %v1142
  %v1144 = vsel %vm1132, %v1122, %v1125
  %v1145 = vsel %vm1135, %v1131, 1326507024
  %v1146 = vsel %vm1134, %v1128, %v1145
  %v1147 = vsel %vm1133, %v1144, %v1146
  %v1148 = vshll.u32 %v1108, 8
  %v1149 = vmul.u32.u64.compose %v1148, %v1147
  %v1150 = vextract.low.u32 %v1149
  %v1151 = vextract.high.u32 %v1149
  %v1152 = vmul.u32.u64.compose %v1148, %v1143
  %v1153 = vextract.low.u32 %v1152
  %v1154 = vextract.high.u32 %v1152
  %v1155 = vmul.u32 %v1148, %v1139
  %v1156 = vadd.s32 %v1151, %v1153
  %vm1157 = vc.u32 %v1151, %v1153
  %v1158 = vadd.s32 %v1154, 1
  %v1159 = vsel %vm1157, %v1158, %v1154
  %v1160 = vadd.s32 %v1155, %v1159
  %v1161 = vadd.s32 %v1160, 536870912
  %v1162 = vshrl.u32 %v1161, 30
  %v1163 = vshll.u32 %v1162, 30
  %v1164 = vsub.s32 %v1160, %v1163
  %vm1165 = vcmp.lt.s32.totalorder %v1164, 0
  %v1166 = vsub.s32 0, %v1164
  %v1167 = vsel %vm1165, %v1166, %v1164
  %v1168 = vclz %v1167
  %v1169 = vsub.s32 %v1168, 2
  %vm1170 = vcmp.gt.s32.totalorder 0, %v1169
  %v1171 = vsel %vm1170, 0, %v1169
  %v1172 = vsub.s32 32, %v1171
  %v1173 = vshll.u32 %v1164, %v1171
  %v1174 = vshrl.u32 %v1156, %v1172
  %v1175 = vor.u32 %v1173, %v1174
  %v1176 = vsub.s32 4294967266, %v1171
  %v1177 = vadd.s32 %v1176, 127
  %v1178 = vshll.u32 %v1177, 23
  %v1179 = vor.u32 4788187, %v1178
  %v1180 = vand.u32 2147483647, %v1179
  %v1182 = vcvt.s32.f32 %v1175
  %v1183 = vmul.f32 %v1182, %v1180
  %v1184 = vxor.u32 %v1183, 2147483648
  %v1185 = vsel %vm1102, %v1184, %v1183
  %v1186 = vsub.s32 4, %v1162
  %v1187 = vsel %vm1102, %v1186, %v1162
  %v1188 = vsel %vm1101, %v888, %v1185
  %v1189 = vsel %vm1101, 0, %v1187
  %v1190 = vcosq.f32.pop %v1188
  %v1191 = vsinq.f32.pop %v1188
  %vm1192 = vweird.f32 %v888
  %v1193 = vand.u32 %v1189, 3
  %vm1194 = vcmp.lt.s32.totalorder %v1193, 2
  %vm1195 = vcmp.eq.s32.totalorder %v1193, 0
  %v1196 = vxor.u32 %v1191, 2147483648
  %v1197 = vsel %vm1195, %v1190, %v1196
  %vm1198 = vcmp.eq.s32.totalorder %v1193, 2
  %v1199 = vxor.u32 %v1190, 2147483648
  %v1200 = vsel %vm1198, %v1199, %v1191
  %v1201 = vsel %vm1194, %v1197, %v1200
  %v1202 = vsel %vm1192, nan, %v1201
  %v1203 = vand.u32 2147483647, %v889
  %vm1204 = vcmp.le.f32.partialorder %v1203, 0.7853982
  %vm1205 = vcmp.lt.s32.totalorder %v889, 0
  %v1206 = vand.u32 %v889, 2139095040
  %v1207 = vshrl.u32 %v1206, 23
  %v1208 = vsub.s32 %v1207, 127
  %v1209 = vand.u32 2147483647, %v889
  %v1210 = vand.u32 %v1209, 8388607
  %v1211 = vor.u32 %v1210, 8388608
  %v1212 = vsub.s32 0, %v1211
  %v1213 = vadd.s32 %v1208, 1
  %vm1214 = vcmp.gt.s32.totalorder %v1213, 0
  %v1215 = vsel %vm1214, %v1213, 0
  %v1216 = vshrl.u32 %v1215, 5
  %v1217 = vand.u32 %v1215, 31
  %v1218 = vsub.s32 32, %v1217
  %v1219 = vshrl.u32 683565275, %v1218
  %v1220 = vshll.u32 683565275, %v1217
  %v1221 = vshrl.u32 2475754826, %v1218
  %v1222 = vor.u32 %v1220, %v1221
  %v1223 = vshll.u32 2475754826, %v1217
  %v1224 = vshrl.u32 2131351028, %v1218
  %v1225 = vor.u32 %v1223, %v1224
  %v1226 = vshll.u32 2131351028, %v1217
  %v1227 = vshrl.u32 2102212464, %v1218
  %v1228 = vor.u32 %v1226, %v1227
  %v1229 = vshll.u32 2102212464, %v1217
  %v1230 = vshrl.u32 920167782, %v1218
  %v1231 = vor.u32 %v1229, %v1230
  %v1232 = vshll.u32 920167782, %v1217
  %v1233 = vshrl.u32 1326507024, %v1218
  %v1234 = vor.u32 %v1232, %v1233
  %vm1235 = vcmp.lt.s32.totalorder %v1216, 1
  %vm1236 = vcmp.lt.s32.totalorder %v1216, 2
  %vm1237 = vcmp.lt.s32.totalorder %v1216, 3
  %vm1238 = vcmp.lt.s32.totalorder %v1216, 4
  %v1239 = vsel %vm1235, %v1219, %v1222
  %v1240 = vsel %vm1238, %v1228, 2102212464
  %v1241 = vsel %vm1237, %v1225, %v1240
  %v1242 = vsel %vm1236, %v1239, %v1241
  %v1243 = vsel %vm1235, %v1222, %v1225
  %v1244 = vsel %vm1238, %v1231, 920167782
  %v1245 = vsel %vm1237, %v1228, %v1244
  %v1246 = vsel %vm1236, %v1243, %v1245
  %v1247 = vsel %vm1235, %v1225, %v1228
  %v1248 = vsel %vm1238, %v1234, 1326507024
  %v1249 = vsel %vm1237, %v1231, %v1248
  %v1250 = vsel %vm1236, %v1247, %v1249
  %v1251 = vshll.u32 %v1211, 8
  %v1252 = vmul.u32.u64.compose %v1251, %v1250
  %v1253 = vextract.low.u32 %v1252
  %v1254 = vextract.high.u32 %v1252
  %v1255 = vmul.u32.u64.compose %v1251, %v1246
  %v1256 = vextract.low.u32 %v1255
  %v1257 = vextract.high.u32 %v1255
  %v1258 = vmul.u32 %v1251, %v1242
  %v1259 = vadd.s32 %v1254, %v1256
  %vm1260 = vc.u32 %v1254, %v1256
  %v1261 = vadd.s32 %v1257, 1
  %v1262 = vsel %vm1260, %v1261, %v1257
  %v1263 = vadd.s32 %v1258, %v1262
  %v1264 = vadd.s32 %v1263, 536870912
  %v1265 = vshrl.u32 %v1264, 30
  %v1266 = vshll.u32 %v1265, 30
  %v1267 = vsub.s32 %v1263, %v1266
  %vm1268 = vcmp.lt.s32.totalorder %v1267, 0
  %v1269 = vsub.s32 0, %v1267
  %v1270 = vsel %vm1268, %v1269, %v1267
  %v1271 = vclz %v1270
  %v1272 = vsub.s32 %v1271, 2
  %vm1273 = vcmp.gt.s32.totalorder 0, %v1272
  %v1274 = vsel %vm1273, 0, %v1272
  %v1275 = vsub.s32 32, %v1274
  %v1276 = vshll.u32 %v1267, %v1274
  %v1277 = vshrl.u32 %v1259, %v1275
  %v1278 = vor.u32 %v1276, %v1277
  %v1279 = vsub.s32 4294967266, %v1274
  %v1280 = vadd.s32 %v1279, 127
  %v1281 = vshll.u32 %v1280, 23
  %v1282 = vor.u32 4788187, %v1281
  %v1283 = vand.u32 2147483647, %v1282
  %v1285 = vcvt.s32.f32 %v1278
  %v1286 = vmul.f32 %v1285, %v1283
  %v1287 = vxor.u32 %v1286, 2147483648
  %v1288 = vsel %vm1205, %v1287, %v1286
  %v1289 = vsub.s32 4, %v1265
  %v1290 = vsel %vm1205, %v1289, %v1265
  %v1291 = vsel %vm1204, %v889, %v1288
  %v1292 = vsel %vm1204, 0, %v1290
  %v1293 = vcosq.f32.pop %v1291
  %v1294 = vsinq.f32.pop %v1291
  %vm1295 = vweird.f32 %v889
  %v1296 = vand.u32 %v1292, 3
  %vm1297 = vcmp.lt.s32.totalorder %v1296, 2
  %vm1298 = vcmp.eq.s32.totalorder %v1296, 0
  %v1299 = vxor.u32 %v1294, 2147483648
  %v1300 = vsel %vm1298, %v1293, %v1299
  %vm1301 = vcmp.eq.s32.totalorder %v1296, 2
  %v1302 = vxor.u32 %v1293, 2147483648
  %v1303 = vsel %vm1301, %v1302, %v1294
  %v1304 = vsel %vm1297, %v1300, %v1303
  %v1305 = vsel %vm1295, nan, %v1304
  %v1306 = vpack.c.bf16 %v1305, %v1202
  %1307 = vst [vmem:[#allocation2 + $0x30] sm:$0xff] %v1306
  %v1308 = vld [vmem:[%s0 + $0x3] sm:$0x1]
  %v1309 = vlaneseq
  %v1310 = vshrl.u32 %v1309, 7
  %v1311 = vsub.s32 0, %v1310
  %v1312 = vrot.slane %v1308, %v1311
  %v1313 = vmul.f32 %v27, %v1312
  %v1314 = vmul.f32 %v32, %v1312
  %v1315 = vand.u32 2147483647, %v1313
  %vm1316 = vcmp.le.f32.partialorder %v1315, 0.7853982
  %vm1317 = vcmp.lt.s32.totalorder %v1313, 0
  %v1318 = vand.u32 %v1313, 2139095040
  %v1319 = vshrl.u32 %v1318, 23
  %v1320 = vsub.s32 %v1319, 127
  %v1321 = vand.u32 2147483647, %v1313
  %v1322 = vand.u32 %v1321, 8388607
  %v1323 = vor.u32 %v1322, 8388608
  %v1324 = vsub.s32 0, %v1323
  %v1325 = vadd.s32 %v1320, 1
  %vm1326 = vcmp.gt.s32.totalorder %v1325, 0
  %v1327 = vsel %vm1326, %v1325, 0
  %v1328 = vshrl.u32 %v1327, 5
  %v1329 = vand.u32 %v1327, 31
  %v1330 = vsub.s32 32, %v1329
  %v1331 = vshrl.u32 683565275, %v1330
  %v1332 = vshll.u32 683565275, %v1329
  %v1333 = vshrl.u32 2475754826, %v1330
  %v1334 = vor.u32 %v1332, %v1333
  %v1335 = vshll.u32 2475754826, %v1329
  %v1336 = vshrl.u32 2131351028, %v1330
  %v1337 = vor.u32 %v1335, %v1336
  %v1338 = vshll.u32 2131351028, %v1329
  %v1339 = vshrl.u32 2102212464, %v1330
  %v1340 = vor.u32 %v1338, %v1339
  %v1341 = vshll.u32 2102212464, %v1329
  %v1342 = vshrl.u32 920167782, %v1330
  %v1343 = vor.u32 %v1341, %v1342
  %v1344 = vshll.u32 920167782, %v1329
  %v1345 = vshrl.u32 1326507024, %v1330
  %v1346 = vor.u32 %v1344, %v1345
  %vm1347 = vcmp.lt.s32.totalorder %v1328, 1
  %vm1348 = vcmp.lt.s32.totalorder %v1328, 2
  %vm1349 = vcmp.lt.s32.totalorder %v1328, 3
  %vm1350 = vcmp.lt.s32.totalorder %v1328, 4
  %v1351 = vsel %vm1347, %v1331, %v1334
  %v1352 = vsel %vm1350, %v1340, 2102212464
  %v1353 = vsel %vm1349, %v1337, %v1352
  %v1354 = vsel %vm1348, %v1351, %v1353
  %v1355 = vsel %vm1347, %v1334, %v1337
  %v1356 = vsel %vm1350, %v1343, 920167782
  %v1357 = vsel %vm1349, %v1340, %v1356
  %v1358 = vsel %vm1348, %v1355, %v1357
  %v1359 = vsel %vm1347, %v1337, %v1340
  %v1360 = vsel %vm1350, %v1346, 1326507024
  %v1361 = vsel %vm1349, %v1343, %v1360
  %v1362 = vsel %vm1348, %v1359, %v1361
  %v1363 = vshll.u32 %v1323, 8
  %v1364 = vmul.u32.u64.compose %v1363, %v1362
  %v1365 = vextract.low.u32 %v1364
  %v1366 = vextract.high.u32 %v1364
  %v1367 = vmul.u32.u64.compose %v1363, %v1358
  %v1368 = vextract.low.u32 %v1367
  %v1369 = vextract.high.u32 %v1367
  %v1370 = vmul.u32 %v1363, %v1354
  %v1371 = vadd.s32 %v1366, %v1368
  %vm1372 = vc.u32 %v1366, %v1368
  %v1373 = vadd.s32 %v1369, 1
  %v1374 = vsel %vm1372, %v1373, %v1369
  %v1375 = vadd.s32 %v1370, %v1374
  %v1376 = vadd.s32 %v1375, 536870912
  %v1377 = vshrl.u32 %v1376, 30
  %v1378 = vshll.u32 %v1377, 30
  %v1379 = vsub.s32 %v1375, %v1378
  %vm1380 = vcmp.lt.s32.totalorder %v1379, 0
  %v1381 = vsub.s32 0, %v1379
  %v1382 = vsel %vm1380, %v1381, %v1379
  %v1383 = vclz %v1382
  %v1384 = vsub.s32 %v1383, 2
  %vm1385 = vcmp.gt.s32.totalorder 0, %v1384
  %v1386 = vsel %vm1385, 0, %v1384
  %v1387 = vsub.s32 32, %v1386
  %v1388 = vshll.u32 %v1379, %v1386
  %v1389 = vshrl.u32 %v1371, %v1387
  %v1390 = vor.u32 %v1388, %v1389
  %v1391 = vsub.s32 4294967266, %v1386
  %v1392 = vadd.s32 %v1391, 127
  %v1393 = vshll.u32 %v1392, 23
  %v1394 = vor.u32 4788187, %v1393
  %v1395 = vand.u32 2147483647, %v1394
  %v1397 = vcvt.s32.f32 %v1390
  %v1398 = vmul.f32 %v1397, %v1395
  %v1399 = vxor.u32 %v1398, 2147483648
  %v1400 = vsel %vm1317, %v1399, %v1398
  %v1401 = vsub.s32 4, %v1377
  %v1402 = vsel %vm1317, %v1401, %v1377
  %v1403 = vsel %vm1316, %v1313, %v1400
  %v1404 = vsel %vm1316, 0, %v1402
  %v1405 = vcosq.f32.pop %v1403
  %v1406 = vsinq.f32.pop %v1403
  %vm1407 = vweird.f32 %v1313
  %v1408 = vadd.s32 %v1404, 3
  %v1409 = vand.u32 %v1408, 3
  %vm1410 = vcmp.lt.s32.totalorder %v1409, 2
  %vm1411 = vcmp.eq.s32.totalorder %v1409, 0
  %v1412 = vxor.u32 %v1406, 2147483648
  %v1413 = vsel %vm1411, %v1405, %v1412
  %vm1414 = vcmp.eq.s32.totalorder %v1409, 2
  %v1415 = vxor.u32 %v1405, 2147483648
  %v1416 = vsel %vm1414, %v1415, %v1406
  %v1417 = vsel %vm1410, %v1413, %v1416
  %v1418 = vsel %vm1407, nan, %v1417
  %v1419 = vand.u32 2147483647, %v1314
  %vm1420 = vcmp.le.f32.partialorder %v1419, 0.7853982
  %vm1421 = vcmp.lt.s32.totalorder %v1314, 0
  %v1422 = vand.u32 %v1314, 2139095040
  %v1423 = vshrl.u32 %v1422, 23
  %v1424 = vsub.s32 %v1423, 127
  %v1425 = vand.u32 2147483647, %v1314
  %v1426 = vand.u32 %v1425, 8388607
  %v1427 = vor.u32 %v1426, 8388608
  %v1428 = vsub.s32 0, %v1427
  %v1429 = vadd.s32 %v1424, 1
  %vm1430 = vcmp.gt.s32.totalorder %v1429, 0
  %v1431 = vsel %vm1430, %v1429, 0
  %v1432 = vshrl.u32 %v1431, 5
  %v1433 = vand.u32 %v1431, 31
  %v1434 = vsub.s32 32, %v1433
  %v1435 = vshrl.u32 683565275, %v1434
  %v1436 = vshll.u32 683565275, %v1433
  %v1437 = vshrl.u32 2475754826, %v1434
  %v1438 = vor.u32 %v1436, %v1437
  %v1439 = vshll.u32 2475754826, %v1433
  %v1440 = vshrl.u32 2131351028, %v1434
  %v1441 = vor.u32 %v1439, %v1440
  %v1442 = vshll.u32 2131351028, %v1433
  %v1443 = vshrl.u32 2102212464, %v1434
  %v1444 = vor.u32 %v1442, %v1443
  %v1445 = vshll.u32 2102212464, %v1433
  %v1446 = vshrl.u32 920167782, %v1434
  %v1447 = vor.u32 %v1445, %v1446
  %v1448 = vshll.u32 920167782, %v1433
  %v1449 = vshrl.u32 1326507024, %v1434
  %v1450 = vor.u32 %v1448, %v1449
  %vm1451 = vcmp.lt.s32.totalorder %v1432, 1
  %vm1452 = vcmp.lt.s32.totalorder %v1432, 2
  %vm1453 = vcmp.lt.s32.totalorder %v1432, 3
  %vm1454 = vcmp.lt.s32.totalorder %v1432, 4
  %v1455 = vsel %vm1451, %v1435, %v1438
  %v1456 = vsel %vm1454, %v1444, 2102212464
  %v1457 = vsel %vm1453, %v1441, %v1456
  %v1458 = vsel %vm1452, %v1455, %v1457
  %v1459 = vsel %vm1451, %v1438, %v1441
  %v1460 = vsel %vm1454, %v1447, 920167782
  %v1461 = vsel %vm1453, %v1444, %v1460
  %v1462 = vsel %vm1452, %v1459, %v1461
  %v1463 = vsel %vm1451, %v1441, %v1444
  %v1464 = vsel %vm1454, %v1450, 1326507024
  %v1465 = vsel %vm1453, %v1447, %v1464
  %v1466 = vsel %vm1452, %v1463, %v1465
  %v1467 = vshll.u32 %v1427, 8
  %v1468 = vmul.u32.u64.compose %v1467, %v1466
  %v1469 = vextract.low.u32 %v1468
  %v1470 = vextract.high.u32 %v1468
  %v1471 = vmul.u32.u64.compose %v1467, %v1462
  %v1472 = vextract.low.u32 %v1471
  %v1473 = vextract.high.u32 %v1471
  %v1474 = vmul.u32 %v1467, %v1458
  %v1475 = vadd.s32 %v1470, %v1472
  %vm1476 = vc.u32 %v1470, %v1472
  %v1477 = vadd.s32 %v1473, 1
  %v1478 = vsel %vm1476, %v1477, %v1473
  %v1479 = vadd.s32 %v1474, %v1478
  %v1480 = vadd.s32 %v1479, 536870912
  %v1481 = vshrl.u32 %v1480, 30
  %v1482 = vshll.u32 %v1481, 30
  %v1483 = vsub.s32 %v1479, %v1482
  %vm1484 = vcmp.lt.s32.totalorder %v1483, 0
  %v1485 = vsub.s32 0, %v1483
  %v1486 = vsel %vm1484, %v1485, %v1483
  %v1487 = vclz %v1486
  %v1488 = vsub.s32 %v1487, 2
  %vm1489 = vcmp.gt.s32.totalorder 0, %v1488
  %v1490 = vsel %vm1489, 0, %v1488
  %v1491 = vsub.s32 32, %v1490
  %v1492 = vshll.u32 %v1483, %v1490
  %v1493 = vshrl.u32 %v1475, %v1491
  %v1494 = vor.u32 %v1492, %v1493
  %v1495 = vsub.s32 4294967266, %v1490
  %v1496 = vadd.s32 %v1495, 127
  %v1497 = vshll.u32 %v1496, 23
  %v1498 = vor.u32 4788187, %v1497
  %v1499 = vand.u32 2147483647, %v1498
  %v1501 = vcvt.s32.f32 %v1494
  %v1502 = vmul.f32 %v1501, %v1499
  %v1503 = vxor.u32 %v1502, 2147483648
  %v1504 = vsel %vm1421, %v1503, %v1502
  %v1505 = vsub.s32 4, %v1481
  %v1506 = vsel %vm1421, %v1505, %v1481
  %v1507 = vsel %vm1420, %v1314, %v1504
  %v1508 = vsel %vm1420, 0, %v1506
  %v1509 = vcosq.f32.pop %v1507
  %v1510 = vsinq.f32.pop %v1507
  %vm1511 = vweird.f32 %v1314
  %v1512 = vadd.s32 %v1508, 3
  %v1513 = vand.u32 %v1512, 3
  %vm1514 = vcmp.lt.s32.totalorder %v1513, 2
  %vm1515 = vcmp.eq.s32.totalorder %v1513, 0
  %v1516 = vxor.u32 %v1510, 2147483648
  %v1517 = vsel %vm1515, %v1509, %v1516
  %vm1518 = vcmp.eq.s32.totalorder %v1513, 2
  %v1519 = vxor.u32 %v1509, 2147483648
  %v1520 = vsel %vm1518, %v1519, %v1510
  %v1521 = vsel %vm1514, %v1517, %v1520
  %v1522 = vsel %vm1511, nan, %v1521
  %v1523 = vpack.c.bf16 %v1522, %v1418
  %1524 = vst [vmem:[#allocation2 + $0x18] sm:$0xff] %v1523
  %v1525 = vand.u32 2147483647, %v1313
  %vm1526 = vcmp.le.f32.partialorder %v1525, 0.7853982
  %vm1527 = vcmp.lt.s32.totalorder %v1313, 0
  %v1528 = vand.u32 %v1313, 2139095040
  %v1529 = vshrl.u32 %v1528, 23
  %v1530 = vsub.s32 %v1529, 127
  %v1531 = vand.u32 2147483647, %v1313
  %v1532 = vand.u32 %v1531, 8388607
  %v1533 = vor.u32 %v1532, 8388608
  %v1534 = vsub.s32 0, %v1533
  %v1535 = vadd.s32 %v1530, 1
  %vm1536 = vcmp.gt.s32.totalorder %v1535, 0
  %v1537 = vsel %vm1536, %v1535, 0
  %v1538 = vshrl.u32 %v1537, 5
  %v1539 = vand.u32 %v1537, 31
  %v1540 = vsub.s32 32, %v1539
  %v1541 = vshrl.u32 683565275, %v1540
  %v1542 = vshll.u32 683565275, %v1539
  %v1543 = vshrl.u32 2475754826, %v1540
  %v1544 = vor.u32 %v1542, %v1543
  %v1545 = vshll.u32 2475754826, %v1539
  %v1546 = vshrl.u32 2131351028, %v1540
  %v1547 = vor.u32 %v1545, %v1546
  %v1548 = vshll.u32 2131351028, %v1539
  %v1549 = vshrl.u32 2102212464, %v1540
  %v1550 = vor.u32 %v1548, %v1549
  %v1551 = vshll.u32 2102212464, %v1539
  %v1552 = vshrl.u32 920167782, %v1540
  %v1553 = vor.u32 %v1551, %v1552
  %v1554 = vshll.u32 920167782, %v1539
  %v1555 = vshrl.u32 1326507024, %v1540
  %v1556 = vor.u32 %v1554, %v1555
  %vm1557 = vcmp.lt.s32.totalorder %v1538, 1
  %vm1558 = vcmp.lt.s32.totalorder %v1538, 2
  %vm1559 = vcmp.lt.s32.totalorder %v1538, 3
  %vm1560 = vcmp.lt.s32.totalorder %v1538, 4
  %v1561 = vsel %vm1557, %v1541, %v1544
  %v1562 = vsel %vm1560, %v1550, 2102212464
  %v1563 = vsel %vm1559, %v1547, %v1562
  %v1564 = vsel %vm1558, %v1561, %v1563
  %v1565 = vsel %vm1557, %v1544, %v1547
  %v1566 = vsel %vm1560, %v1553, 920167782
  %v1567 = vsel %vm1559, %v1550, %v1566
  %v1568 = vsel %vm1558, %v1565, %v1567
  %v1569 = vsel %vm1557, %v1547, %v1550
  %v1570 = vsel %vm1560, %v1556, 1326507024
  %v1571 = vsel %vm1559, %v1553, %v1570
  %v1572 = vsel %vm1558, %v1569, %v1571
  %v1573 = vshll.u32 %v1533, 8
  %v1574 = vmul.u32.u64.compose %v1573, %v1572
  %v1575 = vextract.low.u32 %v1574
  %v1576 = vextract.high.u32 %v1574
  %v1577 = vmul.u32.u64.compose %v1573, %v1568
  %v1578 = vextract.low.u32 %v1577
  %v1579 = vextract.high.u32 %v1577
  %v1580 = vmul.u32 %v1573, %v1564
  %v1581 = vadd.s32 %v1576, %v1578
  %vm1582 = vc.u32 %v1576, %v1578
  %v1583 = vadd.s32 %v1579, 1
  %v1584 = vsel %vm1582, %v1583, %v1579
  %v1585 = vadd.s32 %v1580, %v1584
  %v1586 = vadd.s32 %v1585, 536870912
  %v1587 = vshrl.u32 %v1586, 30
  %v1588 = vshll.u32 %v1587, 30
  %v1589 = vsub.s32 %v1585, %v1588
  %vm1590 = vcmp.lt.s32.totalorder %v1589, 0
  %v1591 = vsub.s32 0, %v1589
  %v1592 = vsel %vm1590, %v1591, %v1589
  %v1593 = vclz %v1592
  %v1594 = vsub.s32 %v1593, 2
  %vm1595 = vcmp.gt.s32.totalorder 0, %v1594
  %v1596 = vsel %vm1595, 0, %v1594
  %v1597 = vsub.s32 32, %v1596
  %v1598 = vshll.u32 %v1589, %v1596
  %v1599 = vshrl.u32 %v1581, %v1597
  %v1600 = vor.u32 %v1598, %v1599
  %v1601 = vsub.s32 4294967266, %v1596
  %v1602 = vadd.s32 %v1601, 127
  %v1603 = vshll.u32 %v1602, 23
  %v1604 = vor.u32 4788187, %v1603
  %v1605 = vand.u32 2147483647, %v1604
  %v1607 = vcvt.s32.f32 %v1600
  %v1608 = vmul.f32 %v1607, %v1605
  %v1609 = vxor.u32 %v1608, 2147483648
  %v1610 = vsel %vm1527, %v1609, %v1608
  %v1611 = vsub.s32 4, %v1587
  %v1612 = vsel %vm1527, %v1611, %v1587
  %v1613 = vsel %vm1526, %v1313, %v1610
  %v1614 = vsel %vm1526, 0, %v1612
  %v1615 = vcosq.f32.pop %v1613
  %v1616 = vsinq.f32.pop %v1613
  %vm1617 = vweird.f32 %v1313
  %v1618 = vand.u32 %v1614, 3
  %vm1619 = vcmp.lt.s32.totalorder %v1618, 2
  %vm1620 = vcmp.eq.s32.totalorder %v1618, 0
  %v1621 = vxor.u32 %v1616, 2147483648
  %v1622 = vsel %vm1620, %v1615, %v1621
  %vm1623 = vcmp.eq.s32.totalorder %v1618, 2
  %v1624 = vxor.u32 %v1615, 2147483648
  %v1625 = vsel %vm1623, %v1624, %v1616
  %v1626 = vsel %vm1619, %v1622, %v1625
  %v1627 = vsel %vm1617, nan, %v1626
  %v1628 = vand.u32 2147483647, %v1314
  %vm1629 = vcmp.le.f32.partialorder %v1628, 0.7853982
  %vm1630 = vcmp.lt.s32.totalorder %v1314, 0
  %v1631 = vand.u32 %v1314, 2139095040
  %v1632 = vshrl.u32 %v1631, 23
  %v1633 = vsub.s32 %v1632, 127
  %v1634 = vand.u32 2147483647, %v1314
  %v1635 = vand.u32 %v1634, 8388607
  %v1636 = vor.u32 %v1635, 8388608
  %v1637 = vsub.s32 0, %v1636
  %v1638 = vadd.s32 %v1633, 1
  %vm1639 = vcmp.gt.s32.totalorder %v1638, 0
  %v1640 = vsel %vm1639, %v1638, 0
  %v1641 = vshrl.u32 %v1640, 5
  %v1642 = vand.u32 %v1640, 31
  %v1643 = vsub.s32 32, %v1642
  %v1644 = vshrl.u32 683565275, %v1643
  %v1645 = vshll.u32 683565275, %v1642
  %v1646 = vshrl.u32 2475754826, %v1643
  %v1647 = vor.u32 %v1645, %v1646
  %v1648 = vshll.u32 2475754826, %v1642
  %v1649 = vshrl.u32 2131351028, %v1643
  %v1650 = vor.u32 %v1648, %v1649
  %v1651 = vshll.u32 2131351028, %v1642
  %v1652 = vshrl.u32 2102212464, %v1643
  %v1653 = vor.u32 %v1651, %v1652
  %v1654 = vshll.u32 2102212464, %v1642
  %v1655 = vshrl.u32 920167782, %v1643
  %v1656 = vor.u32 %v1654, %v1655
  %v1657 = vshll.u32 920167782, %v1642
  %v1658 = vshrl.u32 1326507024, %v1643
  %v1659 = vor.u32 %v1657, %v1658
  %vm1660 = vcmp.lt.s32.totalorder %v1641, 1
  %vm1661 = vcmp.lt.s32.totalorder %v1641, 2
  %vm1662 = vcmp.lt.s32.totalorder %v1641, 3
  %vm1663 = vcmp.lt.s32.totalorder %v1641, 4
  %v1664 = vsel %vm1660, %v1644, %v1647
  %v1665 = vsel %vm1663, %v1653, 2102212464
  %v1666 = vsel %vm1662, %v1650, %v1665
  %v1667 = vsel %vm1661, %v1664, %v1666
  %v1668 = vsel %vm1660, %v1647, %v1650
  %v1669 = vsel %vm1663, %v1656, 920167782
  %v1670 = vsel %vm1662, %v1653, %v1669
  %v1671 = vsel %vm1661, %v1668, %v1670
  %v1672 = vsel %vm1660, %v1650, %v1653
  %v1673 = vsel %vm1663, %v1659, 1326507024
  %v1674 = vsel %vm1662, %v1656, %v1673
  %v1675 = vsel %vm1661, %v1672, %v1674
  %v1676 = vshll.u32 %v1636, 8
  %v1677 = vmul.u32.u64.compose %v1676, %v1675
  %v1678 = vextract.low.u32 %v1677
  %v1679 = vextract.high.u32 %v1677
  %v1680 = vmul.u32.u64.compose %v1676, %v1671
  %v1681 = vextract.low.u32 %v1680
  %v1682 = vextract.high.u32 %v1680
  %v1683 = vmul.u32 %v1676, %v1667
  %v1684 = vadd.s32 %v1679, %v1681
  %vm1685 = vc.u32 %v1679, %v1681
  %v1686 = vadd.s32 %v1682, 1
  %v1687 = vsel %vm1685, %v1686, %v1682
  %v1688 = vadd.s32 %v1683, %v1687
  %v1689 = vadd.s32 %v1688, 536870912
  %v1690 = vshrl.u32 %v1689, 30
  %v1691 = vshll.u32 %v1690, 30
  %v1692 = vsub.s32 %v1688, %v1691
  %vm1693 = vcmp.lt.s32.totalorder %v1692, 0
  %v1694 = vsub.s32 0, %v1692
  %v1695 = vsel %vm1693, %v1694, %v1692
  %v1696 = vclz %v1695
  %v1697 = vsub.s32 %v1696, 2
  %vm1698 = vcmp.gt.s32.totalorder 0, %v1697
  %v1699 = vsel %vm1698, 0, %v1697
  %v1700 = vsub.s32 32, %v1699
  %v1701 = vshll.u32 %v1692, %v1699
  %v1702 = vshrl.u32 %v1684, %v1700
  %v1703 = vor.u32 %v1701, %v1702
  %v1704 = vsub.s32 4294967266, %v1699
  %v1705 = vadd.s32 %v1704, 127
  %v1706 = vshll.u32 %v1705, 23
  %v1707 = vor.u32 4788187, %v1706
  %v1708 = vand.u32 2147483647, %v1707
  %v1710 = vcvt.s32.f32 %v1703
  %v1711 = vmul.f32 %v1710, %v1708
  %v1712 = vxor.u32 %v1711, 2147483648
  %v1713 = vsel %vm1630, %v1712, %v1711
  %v1714 = vsub.s32 4, %v1690
  %v1715 = vsel %vm1630, %v1714, %v1690
  %v1716 = vsel %vm1629, %v1314, %v1713
  %v1717 = vsel %vm1629, 0, %v1715
  %v1718 = vcosq.f32.pop %v1716
  %v1719 = vsinq.f32.pop %v1716
  %vm1720 = vweird.f32 %v1314
  %v1721 = vand.u32 %v1717, 3
  %vm1722 = vcmp.lt.s32.totalorder %v1721, 2
  %vm1723 = vcmp.eq.s32.totalorder %v1721, 0
  %v1724 = vxor.u32 %v1719, 2147483648
  %v1725 = vsel %vm1723, %v1718, %v1724
  %vm1726 = vcmp.eq.s32.totalorder %v1721, 2
  %v1727 = vxor.u32 %v1718, 2147483648
  %v1728 = vsel %vm1726, %v1727, %v1719
  %v1729 = vsel %vm1722, %v1725, %v1728
  %v1730 = vsel %vm1720, nan, %v1729
  %v1731 = vpack.c.bf16 %v1730, %v1627
  %1732 = vst [vmem:[#allocation2 + $0x38] sm:$0xff] %v1731
  %v1733 = vld [vmem:[%s2] sm:$0xf]
  %v1734 = vld [vmem:[%s2 + $0x4] sm:$0xf]
  %v1735 = vld [vmem:[%s2 + $0x8] sm:$0xf]
  %v1736 = vld [vmem:[%s2 + $0xc] sm:$0xf]
  %v1737 = vld [vmem:[#allocation2] sm:$0xff]
  %v1738 = vld [vmem:[#allocation2 + $0x20] sm:$0xff]
  %v1739 = vld [vmem:[%s3] sm:$0xf]
  %v1740 = vld [vmem:[%s3 + $0x4] sm:$0xf]
  %v1741 = vld [vmem:[%s3 + $0x8] sm:$0xf]
  %v1742 = vld [vmem:[%s3 + $0xc] sm:$0xf]
  %v1743 = vld [vmem:[#allocation2 + $0x8] sm:$0xff]
  %v1744 = vld [vmem:[#allocation2 + $0x10] sm:$0xff]
  %v1745 = vld [vmem:[#allocation2 + $0x18] sm:$0xff]
  %v1746 = vld [vmem:[#allocation2 + $0x28] sm:$0xff]
  %v1747 = vld [vmem:[#allocation2 + $0x30] sm:$0xff]
  %v1748 = vld [vmem:[#allocation2 + $0x38] sm:$0xff]
  %v1753 = vunpack.c.l.b16 %v1739
  %v1754 = vunpack.c.l.b16 %v1740
  %v1755 = vunpack.c.l.b16 %v1741
  %v1756 = vunpack.c.l.b16 %v1742
  %v1757 = vpack.c.b16 %v1754, %v1753
  %v1758 = vpack.c.b16 %v1756, %v1755
  %vm1759 = vcmask 261120
  %v1761 = vsel %vm1759, %v1757, 0
  %v1764 = vsel %vm1759, %v1758, 0
  %1766 = vmatprep.subr.bf16.mxu0 %v1744
  %1767 = vmatpush1.bf16.msra.mxu0 %v1743
  %1768 = vmatprep.subr.bf16.mxu0 %v1747
  %1769 = vmatpush1.bf16.msra.mxu0 %v1746
  %1770 = vmatprep.subr.bf16.mxu0 0
  %1771 = vmatpush1.bf16.msra.mxu0 0
  %1772 = vmatprep.subr.bf16.mxu0 0
  %1773 = vmatpush1.bf16.msra.mxu0 0
  %1774 = vmatprep.subr.bf16.mxu0 0
  %1775 = vmatpush1.bf16.msra.mxu0 0
  %1776 = vmatprep.subr.bf16.mxu0 0
  %1777 = vmatpush1.bf16.msra.mxu0 0
  %1778 = vmatprep.subr.bf16.mxu0 0
  %1779 = vmatpush1.bf16.msra.mxu0 0
  %1780 = vmatprep.subr.bf16.mxu0 0
  %1781 = vmatpush1.bf16.msra.mxu0 0
  %1782 = vmatprep.subr.bf16.mxu0 0
  %1783 = vmatpush1.bf16.msra.mxu0 0
  %1784 = vmatprep.subr.bf16.mxu0 0
  %1785 = vmatpush1.bf16.msra.mxu0 0
  %1786 = vmatprep.subr.bf16.mxu0 0
  %1787 = vmatpush1.bf16.msra.mxu0 0
  %1788 = vmatprep.subr.bf16.mxu0 0
  %1789 = vmatpush1.bf16.msra.mxu0 0
  %1790 = vmatprep.subr.bf16.mxu0 0
  %1791 = vmatpush1.bf16.msra.mxu0 0
  %1792 = vmatprep.subr.bf16.mxu0 0
  %1793 = vmatpush1.bf16.msra.mxu0 0
  %1794 = vmatprep.subr.bf16.mxu0 0
  %1795 = vmatpush1.bf16.msra.mxu0 0
  %1796 = vmatprep.subr.bf16.mxu0 0
  %1797 = vmatpush1.bf16.msra.mxu0 0
  %1798 = vmatprep.mubr.bf16.mxu0 0
  %1799 = vmatmul.mubr.bf16.gmra.mrb[0].mxu0 %v1761
  %v1800 = vpop.f32.mrb[0].mxu0
  %v1801 = vadd.f32 0.0, %v1800
  %v1802 = vpop.f32.mrb[0].mxu0
  %v1803 = vadd.f32 0.0, %v1802
  %v1804 = vpop.f32.mrb[0].mxu0
  %v1805 = vadd.f32 0.0, %v1804
  %v1806 = vpop.f32.mrb[0].mxu0
  %v1807 = vadd.f32 0.0, %v1806
  %1808 = vmatprep.mubr.bf16.mxu0 0
  %1809 = vmatmul.mubr.bf16.gmra.mrb[0].mxu0 %v1764
  %v1810 = vpop.f32.mrb[0].mxu0
  %v1811 = vadd.f32 0.0, %v1810
  %v1812 = vpop.f32.mrb[0].mxu0
  %v1813 = vadd.f32 0.0, %v1812
  %v1814 = vpop.f32.mrb[0].mxu0
  %v1815 = vadd.f32 0.0, %v1814
  %v1816 = vpop.f32.mrb[0].mxu0
  %v1817 = vadd.f32 0.0, %v1816
  %1818 = vdwg.mxu0
  %1819 = vmatprep.subr.bf16.mxu0 0
  %1820 = vmatpush1.bf16.msra.mxu0 %v1745
  %1821 = vmatprep.subr.bf16.mxu0 0
  %1822 = vmatpush1.bf16.msra.mxu0 %v1748
  %1823 = vmatprep.subr.bf16.mxu0 0
  %1824 = vmatpush1.bf16.msra.mxu0 0
  %1825 = vmatprep.subr.bf16.mxu0 0
  %1826 = vmatpush1.bf16.msra.mxu0 0
  %1827 = vmatprep.subr.bf16.mxu0 0
  %1828 = vmatpush1.bf16.msra.mxu0 0
  %1829 = vmatprep.subr.bf16.mxu0 0
  %1830 = vmatpush1.bf16.msra.mxu0 0
  %1831 = vmatprep.subr.bf16.mxu0 0
  %1832 = vmatpush1.bf16.msra.mxu0 0
  %1833 = vmatprep.subr.bf16.mxu0 0
  %1834 = vmatpush1.bf16.msra.mxu0 0
  %1835 = vmatprep.subr.bf16.mxu0 0
  %1836 = vmatpush1.bf16.msra.mxu0 0
  %1837 = vmatprep.subr.bf16.mxu0 0
  %1838 = vmatpush1.bf16.msra.mxu0 0
  %1839 = vmatprep.subr.bf16.mxu0 0
  %1840 = vmatpush1.bf16.msra.mxu0 0
  %1841 = vmatprep.subr.bf16.mxu0 0
  %1842 = vmatpush1.bf16.msra.mxu0 0
  %1843 = vmatprep.subr.bf16.mxu0 0
  %1844 = vmatpush1.bf16.msra.mxu0 0
  %1845 = vmatprep.subr.bf16.mxu0 0
  %1846 = vmatpush1.bf16.msra.mxu0 0
  %1847 = vmatprep.subr.bf16.mxu0 0
  %1848 = vmatpush1.bf16.msra.mxu0 0
  %1849 = vmatprep.subr.bf16.mxu0 0
  %1850 = vmatpush1.bf16.msra.mxu0 0
  %1851 = vmatprep.mubr.bf16.mxu0 0
  %1852 = vmatmul.mubr.bf16.gmra.mrb[0].mxu0 %v1761
  %v1853 = vpop.f32.mrb[0].mxu0
  %v1854 = vadd.f32 0.0, %v1853
  %v1855 = vpop.f32.mrb[0].mxu0
  %v1856 = vpop.f32.mrb[0].mxu0
  %v1857 = vadd.f32 0.0, %v1856
  %v1858 = vpop.f32.mrb[0].mxu0
  %1859 = vmatprep.mubr.bf16.mxu0 0
  %1860 = vmatmul.mubr.bf16.gmra.mrb[0].mxu0 %v1764
  %v1861 = vpop.f32.mrb[0].mxu0
  %v1862 = vadd.f32 0.0, %v1861
  %v1863 = vpop.f32.mrb[0].mxu0
  %v1864 = vpop.f32.mrb[0].mxu0
  %v1865 = vadd.f32 0.0, %v1864
  %v1866 = vpop.f32.mrb[0].mxu0
  %1867 = vdwg.mxu0
  %v1868 = vmax.f32 %v1801, %v1803
  %v1869 = vmax.f32 %v1805, %v1807
  %v1870 = vmax.f32 %v1811, %v1813
  %v1871 = vmax.f32 %v1815, %v1817
  %v1872 = vmax.f32 %v1868, %v1854
  %v1873 = vmax.f32 %v1869, %v1857
  %v1874 = vmax.f32 %v1870, %v1862
  %v1875 = vmax.f32 %v1871, %v1865
  %v1880 = vunpack.c.l.b16 %v1733
  %v1881 = vunpack.c.l.b16 %v1734
  %v1882 = vunpack.c.l.b16 %v1735
  %v1883 = vunpack.c.l.b16 %v1736
  %v1884 = vpack.c.b16 %v1881, %v1880
  %v1885 = vpack.c.b16 %v1883, %v1882
  %v1887 = vsel %vm1759, %v1884, 0
  %v1890 = vsel %vm1759, %v1885, 0
  %1892 = vmatprep.subr.bf16.mxu0 0
  %1893 = vmatpush1.bf16.msra.mxu0 %v1737
  %1894 = vmatprep.subr.bf16.mxu0 0
  %1895 = vmatpush1.bf16.msra.mxu0 %v1738
  %1896 = vmatprep.subr.bf16.mxu0 0
  %1897 = vmatpush1.bf16.msra.mxu0 0
  %1898 = vmatprep.subr.bf16.mxu0 0
  %1899 = vmatpush1.bf16.msra.mxu0 0
  %1900 = vmatprep.subr.bf16.mxu0 0
  %1901 = vmatpush1.bf16.msra.mxu0 0
  %1902 = vmatprep.subr.bf16.mxu0 0
  %1903 = vmatpush1.bf16.msra.mxu0 0
  %1904 = vmatprep.subr.bf16.mxu0 0
  %1905 = vmatpush1.bf16.msra.mxu0 0
  %1906 = vmatprep.subr.bf16.mxu0 0
  %1907 = vmatpush1.bf16.msra.mxu0 0
  %1908 = vmatprep.subr.bf16.mxu0 0
  %1909 = vmatpush1.bf16.msra.mxu0 0
  %1910 = vmatprep.subr.bf16.mxu0 0
  %1911 = vmatpush1.bf16.msra.mxu0 0
  %1912 = vmatprep.subr.bf16.mxu0 0
  %1913 = vmatpush1.bf16.msra.mxu0 0
  %1914 = vmatprep.subr.bf16.mxu0 0
  %1915 = vmatpush1.bf16.msra.mxu0 0
  %1916 = vmatprep.subr.bf16.mxu0 0
  %1917 = vmatpush1.bf16.msra.mxu0 0
  %1918 = vmatprep.subr.bf16.mxu0 0
  %1919 = vmatpush1.bf16.msra.mxu0 0
  %1920 = vmatprep.subr.bf16.mxu0 0
  %1921 = vmatpush1.bf16.msra.mxu0 0
  %1922 = vmatprep.subr.bf16.mxu0 0
  %1923 = vmatpush1.bf16.msra.mxu0 0
  %1924 = vmatprep.mubr.bf16.mxu0 0
  %1925 = vmatmul.mubr.bf16.gmra.mrb[0].mxu0 %v1887
  %v1926 = vpop.f32.mrb[0].mxu0
  %v1927 = vadd.f32 %v1872, %v1926
  %v1928 = vpop.f32.mrb[0].mxu0
  %v1929 = vpop.f32.mrb[0].mxu0
  %v1930 = vadd.f32 %v1873, %v1929
  %v1931 = vpop.f32.mrb[0].mxu0
  %1932 = vmatprep.mubr.bf16.mxu0 0
  %1933 = vmatmul.mubr.bf16.gmra.mrb[0].mxu0 %v1890
  %v1934 = vpop.f32.mrb[0].mxu0
  %v1935 = vadd.f32 %v1874, %v1934
  %v1936 = vpop.f32.mrb[0].mxu0
  %v1937 = vpop.f32.mrb[0].mxu0
  %v1938 = vadd.f32 %v1875, %v1937
  %v1939 = vpop.f32.mrb[0].mxu0
  %1940 = vdwg.mxu0
  %v1941 = vld [vmem:[%s4] sm:$0xff]
  %v1942 = vld [vmem:[%s4 + $0x8] sm:$0xff]
  %v1943 = vld [vmem:[%s4 + $0x10] sm:$0xff]
  %v1944 = vld [vmem:[%s4 + $0x18] sm:$0xff]
  %1946 = vset.pattern.permute.xlu0 0
  %1947 = vperm.xlu0 %1946, %v1941
  %v1948 = vpop.permute.xlu0 %1947
  %1951 = vset.pattern.permute.xlu0 0
  %1952 = vperm.xlu0 %1951, %v1942
  %v1953 = vpop.permute.xlu0 %1952
  %1956 = vset.pattern.permute.xlu0 0
  %1957 = vperm.xlu0 %1956, %v1943
  %v1958 = vpop.permute.xlu0 %1957
  %1961 = vset.pattern.permute.xlu0 0
  %1962 = vperm.xlu0 %1961, %v1944
  %v1963 = vpop.permute.xlu0 %1962
  %v1965 = vadd.f32 %v1927, %v1948
  %v1966 = vadd.f32 %v1930, %v1953
  %v1967 = vadd.f32 %v1935, %v1958
  %v1968 = vadd.f32 %v1938, %v1963
  %1969 = vst [vmem:[%s5] sm:$0xff] %v1965
  %1970 = vst [vmem:[%s5 + $0x8] sm:$0xff] %v1966
  %1971 = vst [vmem:[%s5 + $0x10] sm:$0xff] %v1967
  %1972 = vst [vmem:[%s5 + $0x18] sm:$0xff] %v1968
  // Predicated region
  $region22: #{geometric_structure_embedding.1} parent=0 // pred_check
    _
  $region23: #{geometric_structure_embedding.1} parent=0 // pred_check_branch
    %1974 = sbr.rel (0) target = $region25
  $region24: #{geometric_structure_embedding.1} parent=0 // pred_region
    _
  $region25: #{geometric_structure_embedding.1} parent=0 // pred_fallthru
    _
  // Predicated region
  $region26: #{geometric_structure_embedding.1} parent=0 // pred_check
    _
  $region27: #{geometric_structure_embedding.1} parent=0 // pred_check_branch
    %1976 = sbr.rel (0) target = $region29
  $region28: #{geometric_structure_embedding.1} parent=0 // pred_region
    _
  $region29: #{geometric_structure_embedding.1} parent=0 // pred_fallthru
    _

</llo_original>
